<compile_context>
chip_gen: v7x
topology: tpu7x:2x2x1
jax: 0.10.0
libtpu: 0.0.40
codegen_flags: <defaults>
</compile_context>

<pallas_src>
import functools

import jax
import jax.numpy as jnp
from jax import lax
from jax.experimental import pallas as pl
from jax.experimental.pallas import tpu as pltpu

BN_EPS = 1e-5


# ----------------------------------------------------------------------------
# Fused Bottleneck kernel: one grid step == `nb` images.
# ----------------------------------------------------------------------------
def _bottleneck_kernel(x_ref, w1_ref, b1_ref, w2_ref, b2_ref, w3_ref, b3_ref,
                       mw1_ref, mb1_ref, mw2_ref, mb2_ref, wsa_ref, mask_ref,
                       o_ref, *, width):
    """Layout: channels in sublanes, flattened spatial (H*W) in lanes.

      x_ref / o_ref : (nb, C, HW)   C == 4*planes == inplanes (identity residual)
      w2_ref        : (3, 3, planes_out, planes_in)   BN2 scale folded
      mask_ref      : (9, HW)       border-validity masks for the 3x3 taps
    All intermediates stay in vregs: no VMEM scratch, no HBM round trips.
    """
    nb, _, hw = x_ref.shape
    planes = w1_ref.shape[0]

    # Tiny weights: load once per grid step (same block every step, so the
    # pipeline does not re-DMA them).
    w1 = w1_ref[...]        # (planes, Cin)
    b1 = b1_ref[...]        # (planes, 1)
    b2 = b2_ref[...]        # (planes, 1)
    w3 = w3_ref[...]        # (Cout, planes)
    b3 = b3_ref[...]        # (Cout, 1)
    mw1 = mw1_ref[...]      # (hidden, Cout)
    mb1 = mb1_ref[...]      # (hidden, 1)
    mw2 = mw2_ref[...]      # (Cout, hidden)
    mb2 = mb2_ref[...]      # (Cout, 1)
    wsa = wsa_ref[...]      # (1, 2)
    masks = mask_ref[...]   # (9, HW)

    for b in range(nb):
        x2d = x_ref[b]                                            # (Cin, HW)

        # --- conv1 (1x1) + folded BN1 + ReLU (stays in vregs).
        h1 = jnp.maximum(
            jnp.dot(w1, x2d, preferred_element_type=jnp.float32) + b1, 0.0)

        # --- conv2 (3x3, stride=1, pad=1) + folded BN2 + ReLU.
        # Spatial taps = lane rolls (XLU) + precomputed border masks (VPU);
        # the accumulator is loop-carried in vregs (no VMEM RMW / padded buf).
        acc = jnp.zeros((planes, hw), jnp.float32)
        for kh in range(3):
            for kw in range(3):
                dh, dw = kh - 1, kw - 1
                src_off = dh * width + dw           # source = s + src_off
                roll_amt = (-src_off) % hw
                tap = h1 if roll_amt == 0 else pltpu.roll(
                    h1, shift=roll_amt, axis=1)
                if dh != 0 or dw != 0:
                    idx = kh * 3 + kw
                    tap = tap * masks[idx:idx + 1, :]
                acc = acc + jnp.dot(w2_ref[kh, kw], tap,
                                    preferred_element_type=jnp.float32)
        h2 = jnp.maximum(acc + b2, 0.0)                           # (planes, HW)

        # --- conv3 (1x1) + folded BN3 (kept in vregs).
        h3 = jnp.dot(w3, h2, preferred_element_type=jnp.float32) + b3  # (C, HW)

        # --- channel attention: lane-axis avg/max pool, ONE merged 2-column
        #     MLP pass (column 0 = avg path, column 1 = max path).
        avg = jnp.mean(h3, axis=1, keepdims=True)                 # (C, 1)
        mx = jnp.max(h3, axis=1, keepdims=True)                   # (C, 1)
        col = lax.broadcasted_iota(jnp.int32, (h3.shape[0], 2), 1)
        pooled = jnp.where(col == 0, avg, mx)                     # (C, 2)
        hdn = jnp.maximum(
            jnp.dot(mw1, pooled, preferred_element_type=jnp.float32) + mb1, 0.0)
        att = jnp.dot(mw2, hdn, preferred_element_type=jnp.float32) + mb2
        ca = jax.nn.sigmoid(jnp.sum(att, axis=1, keepdims=True))  # (C, 1)
        temp = h3 * ca                                            # (C, HW)

        # --- spatial attention: channel (sublane) max/mean -> lane-dense rows.
        s_max = jnp.max(temp, axis=0, keepdims=True)              # (1, HW)
        s_mean = jnp.mean(temp, axis=0, keepdims=True)            # (1, HW)
        sa = jax.nn.sigmoid(s_max * wsa[0:1, 0:1] + s_mean * wsa[0:1, 1:2])

        # --- residual add (downsample=None -> identity) + final ReLU.
        o_ref[b] = jnp.maximum(temp * sa + x2d, 0.0)              # lane-dense store


# ----------------------------------------------------------------------------
# Host-side parameter prep + wrapper.
# ----------------------------------------------------------------------------
def fold_bn(gamma, beta, mean, var):
    scale = gamma / jnp.sqrt(var + BN_EPS)
    bias = beta - mean * scale
    return scale, bias


def _full_spec(a):
    nd = a.ndim
    return pl.BlockSpec(a.shape, lambda i, _nd=nd: (0,) * _nd)


def _conv3x3_border_masks(h, w):
    """(9, H*W) f32 validity masks for the nine 3x3 taps with pad=1."""
    row = jnp.repeat(jnp.arange(h, dtype=jnp.int32), w)
    col = jnp.tile(jnp.arange(w, dtype=jnp.int32), h)
    rows = []
    for kh in range(3):
        for kw in range(3):
            dh, dw = kh - 1, kw - 1
            ok = ((row + dh >= 0) & (row + dh < h)
                  & (col + dw >= 0) & (col + dw < w))
            rows.append(ok.astype(jnp.float32))
    return jnp.stack(rows, axis=0)


def bottleneck_forward(x_nchw, p, *, images_per_step=None):
    """Fused Pallas forward. x_nchw: (N, inplanes, H, W); downsample=None."""
    n, cin, h, w = x_nchw.shape
    planes = p["conv1_w"].shape[0]
    c_out = p["conv3_w"].shape[0]
    hidden = p["mlp_w1"].shape[0]
    hw = h * w
    assert cin == c_out, "downsample=None requires inplanes == planes*expansion"

    # Channels-in-sublanes / spatial-in-lanes layout: NCHW -> (N, C, H*W) is a
    # free reshape (no transpose) and the last dim H*W is lane-dense.
    x3d = x_nchw.reshape(n, cin, hw)

    s1, b1 = fold_bn(p["bn1_gamma"], p["bn1_beta"], p["bn1_mean"], p["bn1_var"])
    s2, b2 = fold_bn(p["bn2_gamma"], p["bn2_beta"], p["bn2_mean"], p["bn2_var"])
    s3, b3 = fold_bn(p["bn3_gamma"], p["bn3_beta"], p["bn3_mean"], p["bn3_var"])

    # Fold BN scales into conv weights on the host (one-time, tiny).
    w1f = p["conv1_w"][:, :, 0, 0] * s1[:, None]                          # (planes, Cin)
    w2f = jnp.transpose(p["conv2_w"], (2, 3, 0, 1)) * s2[None, None, :, None]  # (3,3,out,in)
    w3f = p["conv3_w"][:, :, 0, 0] * s3[:, None]                          # (Cout, planes)

    b1c = b1.reshape(planes, 1)
    b2c = b2.reshape(planes, 1)
    b3c = b3.reshape(c_out, 1)
    mw1 = p["mlp_w1"]                                                     # (hidden, Cout)
    mb1 = p["mlp_b1"].reshape(hidden, 1)
    mw2 = p["mlp_w2"]                                                     # (Cout, hidden)
    mb2 = p["mlp_b2"].reshape(c_out, 1)
    wsa = p["sa_w"].reshape(1, 2)
    mask_tbl = _conv3x3_border_masks(h, w)                                # (9, HW)

    # Batch several images per grid step when N is big enough to still leave
    # >= 4 grid steps (>= 2 per TensorCore on v7x) and blocks stay small.
    if images_per_step is None:
        images_per_step = 1
        per_image_bytes = 4 * (cin + c_out) * hw * 2   # double-buffered in+out
        budget = 8 * 1024 * 1024
        if n >= 8:
            cand = n // 4
            while cand > 1 and (n % cand != 0
                                or cand * per_image_bytes > budget):
                cand -= 1
            images_per_step = max(cand, 1)
    nb = images_per_step
    assert n % nb == 0, (n, nb)
    grid = (n // nb,)

    m = n * hw
    flops = (2 * m * (cin * planes + 9 * planes * planes + planes * c_out)
             + n * 8 * c_out * hidden + 10 * m * c_out)
    cost = pl.CostEstimate(
        flops=flops,
        transcendentals=n * (hw + c_out),               # the two sigmoids
        bytes_accessed=4 * (2 * x3d.size + w1f.size + w2f.size + w3f.size
                            + mw1.size + mw2.size + mask_tbl.size))

    kernel = functools.partial(_bottleneck_kernel, width=w)
    out3d = pl.pallas_call(
        kernel,
        out_shape=jax.ShapeDtypeStruct((n, c_out, hw), jnp.float32),
        grid_spec=pltpu.PrefetchScalarGridSpec(
            num_scalar_prefetch=0,
            grid=grid,
            in_specs=[
                pl.BlockSpec((nb, cin, hw), lambda i: (i, 0, 0)),
                _full_spec(w1f), _full_spec(b1c),
                _full_spec(w2f), _full_spec(b2c),
                _full_spec(w3f), _full_spec(b3c),
                _full_spec(mw1), _full_spec(mb1),
                _full_spec(mw2), _full_spec(mb2),
                _full_spec(wsa), _full_spec(mask_tbl),
            ],
            out_specs=pl.BlockSpec((nb, c_out, hw), lambda i: (i, 0, 0)),
        ),
        compiler_params=pltpu.CompilerParams(
            dimension_semantics=("parallel",)),
        cost_estimate=cost,
    )(x3d, w1f, b1c, w2f, b2c, w3f, b3c, mw1, mb1, mw2, mb2, wsa, mask_tbl)

    # (N, C, H*W) -> (N, C, H, W): metadata-only reshape, no transpose.
    return out3d.reshape(n, c_out, h, w)


# ----------------------------------------------------------------------------
# Deterministic parameter construction.
# ----------------------------------------------------------------------------
def init_params(key, inplanes, planes):
    expansion = 4
    c_out = planes * expansion
    hidden = c_out // 2
    ks = jax.random.split(key, 16)
    p = {}
    # conv weights, PyTorch layout (Cout, Cin, kh, kw)
    p["conv1_w"] = 0.2 * jax.random.normal(ks[0], (planes, inplanes, 1, 1), jnp.float32)
    p["conv2_w"] = 0.2 * jax.random.normal(ks[1], (planes, planes, 3, 3), jnp.float32)
    p["conv3_w"] = 0.2 * jax.random.normal(ks[2], (c_out, planes, 1, 1), jnp.float32)
    # BN params (eval mode: running stats)
    for i, c in zip((1, 2, 3), (planes, planes, c_out)):
        p[f"bn{i}_gamma"] = 1.0 + 0.1 * jax.random.normal(ks[2 + i], (c,), jnp.float32)
        p[f"bn{i}_beta"] = 0.1 * jax.random.normal(ks[5 + i], (c,), jnp.float32)
        p[f"bn{i}_mean"] = 0.1 * jax.random.normal(ks[8 + i], (c,), jnp.float32)
        p[f"bn{i}_var"] = jax.random.uniform(ks[11 + i], (c,), jnp.float32, 0.5, 1.5)
    # attention MLP (PyTorch Linear: weight (out, in), bias (out,))
    p["mlp_w1"] = 0.3 * jax.random.normal(ks[15], (hidden, c_out), jnp.float32)
    p["mlp_b1"] = 0.05 * jnp.arange(hidden, dtype=jnp.float32)
    p["mlp_w2"] = 0.3 * jax.random.normal(jax.random.fold_in(key, 99), (c_out, hidden), jnp.float32)
    p["mlp_b2"] = 0.05 * jnp.arange(c_out, dtype=jnp.float32)
    # spatial attention conv2d(2 -> 1, k=1, bias=False): weight (1, 2, 1, 1)
    p["sa_w"] = jnp.array([0.7, -0.4], jnp.float32)
    return p


# ----------------------------------------------------------------------------
# Pure-JAX reference (mirrors the PyTorch forward in NCHW) for verification.
# ----------------------------------------------------------------------------
def _bn_ref(x, g, b, m, v):
    return (x - m[None, :, None, None]) / jnp.sqrt(v[None, :, None, None] + BN_EPS) \
        * g[None, :, None, None] + b[None, :, None, None]


def bottleneck_reference(x, p):
    dn = ("NCHW", "OIHW", "NCHW")
    out = lax.conv_general_dilated(x, p["conv1_w"], (1, 1), "VALID", dimension_numbers=dn)
    out = jnp.maximum(_bn_ref(out, p["bn1_gamma"], p["bn1_beta"], p["bn1_mean"], p["bn1_var"]), 0.0)
    out = lax.conv_general_dilated(out, p["conv2_w"], (1, 1), [(1, 1), (1, 1)], dimension_numbers=dn)
    out = jnp.maximum(_bn_ref(out, p["bn2_gamma"], p["bn2_beta"], p["bn2_mean"], p["bn2_var"]), 0.0)
    out = lax.conv_general_dilated(out, p["conv3_w"], (1, 1), "VALID", dimension_numbers=dn)
    out = _bn_ref(out, p["bn3_gamma"], p["bn3_beta"], p["bn3_mean"], p["bn3_var"])

    # AttentionBlock
    avg = out.mean(axis=(2, 3))
    mx = out.max(axis=(2, 3))

    def mlp(v):
        hdn = jnp.maximum(v @ p["mlp_w1"].T + p["mlp_b1"], 0.0)
        return hdn @ p["mlp_w2"].T + p["mlp_b2"]

    ca = jax.nn.sigmoid(mlp(avg) + mlp(mx))
    temp = out * ca[:, :, None, None]
    s_max = temp.max(axis=1)
    s_mean = temp.mean(axis=1)
    sa = jax.nn.sigmoid(p["sa_w"][0] * s_max + p["sa_w"][1] * s_mean)[:, None]
    out = temp * sa

    out = out + x                     # downsample is None; inplanes == planes*4
    return jnp.maximum(out, 0.0)


if __name__ == "__main__":
    N, planes, H, W = 2, 4, 16, 16
    inplanes = planes * 4             # so the identity residual add is valid

    key = jax.random.PRNGKey(0)
    kx, kp = jax.random.split(key)
    x = jax.random.normal(kx, (N, inplanes, H, W), jnp.float32)
    params = init_params(kp, inplanes, planes)

    out = jax.block_until_ready(bottleneck_forward(x, params))
    ref = jax.block_until_ready(bottleneck_reference(x, params))

    assert out.shape == (N, planes * 4, H, W), out.shape
    err = jnp.max(jnp.abs(out - ref))
    assert jnp.allclose(out, ref, atol=1e-3, rtol=1e-3), f"max abs err {err}"
    print("KERNEL_OK")
</pallas_src>

<mosaic_0001>
module attributes {stable_mosaic.version = 11 : i64} {
  func.func @_bottleneck_kernel(%arg0: i32, %arg1: memref<1x16x256xf32, #tpu.memory_space<vmem>>, %arg2: memref<4x16xf32, #tpu.memory_space<vmem>>, %arg3: memref<4x1xf32, #tpu.memory_space<vmem>>, %arg4: memref<3x3x4x4xf32, #tpu.memory_space<vmem>>, %arg5: memref<4x1xf32, #tpu.memory_space<vmem>>, %arg6: memref<16x4xf32, #tpu.memory_space<vmem>>, %arg7: memref<16x1xf32, #tpu.memory_space<vmem>>, %arg8: memref<8x16xf32, #tpu.memory_space<vmem>>, %arg9: memref<8x1xf32, #tpu.memory_space<vmem>>, %arg10: memref<16x8xf32, #tpu.memory_space<vmem>>, %arg11: memref<16x1xf32, #tpu.memory_space<vmem>>, %arg12: memref<1x2xf32, #tpu.memory_space<vmem>>, %arg13: memref<9x256xf32, #tpu.memory_space<vmem>>, %arg14: memref<1x16x256xf32, #tpu.memory_space<vmem>>) attributes {dimension_semantics = [#tpu.dimension_semantics<parallel>], iteration_bounds = array<i64: 2>, scalar_prefetch = 0 : i64, scratch_operands = 0 : i64, tpu.core_type = #tpu.core_type<tc>, window_params = [{transform_indices = @transform_0, window_bounds = array<i64: 1, 16, 256>}, {pipeline_mode = #tpu.pipeline_mode<synchronous>, transform_indices = @transform_1, window_bounds = array<i64: 4, 16>}, {pipeline_mode = #tpu.pipeline_mode<synchronous>, transform_indices = @transform_2, window_bounds = array<i64: 4, 1>}, {pipeline_mode = #tpu.pipeline_mode<synchronous>, transform_indices = @transform_3, window_bounds = array<i64: 3, 3, 4, 4>}, {pipeline_mode = #tpu.pipeline_mode<synchronous>, transform_indices = @transform_4, window_bounds = array<i64: 4, 1>}, {pipeline_mode = #tpu.pipeline_mode<synchronous>, transform_indices = @transform_5, window_bounds = array<i64: 16, 4>}, {pipeline_mode = #tpu.pipeline_mode<synchronous>, transform_indices = @transform_6, window_bounds = array<i64: 16, 1>}, {pipeline_mode = #tpu.pipeline_mode<synchronous>, transform_indices = @transform_7, window_bounds = array<i64: 8, 16>}, {pipeline_mode = #tpu.pipeline_mode<synchronous>, transform_indices = @transform_8, window_bounds = array<i64: 8, 1>}, {pipeline_mode = #tpu.pipeline_mode<synchronous>, transform_indices = @transform_9, window_bounds = array<i64: 16, 8>}, {pipeline_mode = #tpu.pipeline_mode<synchronous>, transform_indices = @transform_10, window_bounds = array<i64: 16, 1>}, {pipeline_mode = #tpu.pipeline_mode<synchronous>, transform_indices = @transform_11, window_bounds = array<i64: 1, 2>}, {pipeline_mode = #tpu.pipeline_mode<synchronous>, transform_indices = @transform_12, window_bounds = array<i64: 9, 256>}, {transform_indices = @transform_13, window_bounds = array<i64: 1, 16, 256>}]} {
    %c0 = arith.constant 0 : index
    %c0_0 = arith.constant 0 : index
    %0 = vector.load %arg2[%c0, %c0_0] : memref<4x16xf32, #tpu.memory_space<vmem>>, vector<4x16xf32>
    %c0_1 = arith.constant 0 : index
    %c0_2 = arith.constant 0 : index
    %1 = vector.load %arg3[%c0_1, %c0_2] : memref<4x1xf32, #tpu.memory_space<vmem>>, vector<4x1xf32>
    %c0_3 = arith.constant 0 : index
    %c0_4 = arith.constant 0 : index
    %2 = vector.load %arg5[%c0_3, %c0_4] : memref<4x1xf32, #tpu.memory_space<vmem>>, vector<4x1xf32>
    %c0_5 = arith.constant 0 : index
    %c0_6 = arith.constant 0 : index
    %3 = vector.load %arg6[%c0_5, %c0_6] : memref<16x4xf32, #tpu.memory_space<vmem>>, vector<16x4xf32>
    %c0_7 = arith.constant 0 : index
    %c0_8 = arith.constant 0 : index
    %4 = vector.load %arg7[%c0_7, %c0_8] : memref<16x1xf32, #tpu.memory_space<vmem>>, vector<16x1xf32>
    %c0_9 = arith.constant 0 : index
    %c0_10 = arith.constant 0 : index
    %5 = vector.load %arg8[%c0_9, %c0_10] : memref<8x16xf32, #tpu.memory_space<vmem>>, vector<8x16xf32>
    %c0_11 = arith.constant 0 : index
    %c0_12 = arith.constant 0 : index
    %6 = vector.load %arg9[%c0_11, %c0_12] : memref<8x1xf32, #tpu.memory_space<vmem>>, vector<8x1xf32>
    %c0_13 = arith.constant 0 : index
    %c0_14 = arith.constant 0 : index
    %7 = vector.load %arg10[%c0_13, %c0_14] : memref<16x8xf32, #tpu.memory_space<vmem>>, vector<16x8xf32>
    %c0_15 = arith.constant 0 : index
    %c0_16 = arith.constant 0 : index
    %8 = vector.load %arg11[%c0_15, %c0_16] : memref<16x1xf32, #tpu.memory_space<vmem>>, vector<16x1xf32>
    %c0_17 = arith.constant 0 : index
    %c0_18 = arith.constant 0 : index
    %9 = vector.load %arg12[%c0_17, %c0_18] : memref<1x2xf32, #tpu.memory_space<vmem>>, vector<1x2xf32>
    %c0_19 = arith.constant 0 : index
    %c0_20 = arith.constant 0 : index
    %10 = vector.load %arg13[%c0_19, %c0_20] : memref<9x256xf32, #tpu.memory_space<vmem>>, vector<9x256xf32>
    %c0_21 = arith.constant 0 : index
    %c0_22 = arith.constant 0 : index
    %c0_23 = arith.constant 0 : index
    %11 = vector.load %arg1[%c0_21, %c0_22, %c0_23] : memref<1x16x256xf32, #tpu.memory_space<vmem>>, vector<1x16x256xf32>
    %12 = vector.shape_cast %11 : vector<1x16x256xf32> to vector<16x256xf32>
    %cst = arith.constant dense<0.000000e+00> : vector<4x256xf32>
    %13 = tpu.matmul %0, %12, %cst {dimension_numbers = #tpu.dot_dimension_numbers<[1], [0], [0], [1], [0, 0, 1, 1], [], []>} : vector<4x16xf32>, vector<16x256xf32>, vector<4x256xf32> -> vector<4x256xf32>
    %14 = vector.broadcast %1 : vector<4x1xf32> to vector<4x256xf32>
    %15 = arith.addf %13, %14 : vector<4x256xf32>
    %cst_24 = arith.constant 0.000000e+00 : f32
    %16 = vector.broadcast %cst_24 : f32 to vector<4x256xf32>
    %17 = arith.maximumf %15, %16 : vector<4x256xf32>
    %cst_25 = arith.constant 0.000000e+00 : f32
    %18 = vector.broadcast %cst_25 : f32 to vector<4x256xf32>
    %c17_i32 = arith.constant 17 : i32
    %19 = tpu.dynamic_rotate %17 by %c17_i32 dim 1 : vector<4x256xf32>, i32 -> vector<4x256xf32>
    %20 = vector.extract_strided_slice %10 {offsets = [0, 0], sizes = [1, 256], strides = [1, 1]} : vector<9x256xf32> to vector<1x256xf32>
    %21 = vector.broadcast %20 : vector<1x256xf32> to vector<4x256xf32>
    %22 = arith.mulf %19, %21 : vector<4x256xf32>
    %c0_26 = arith.constant 0 : index
    %c0_27 = arith.constant 0 : index
    %c0_28 = arith.constant 0 : index
    %c0_29 = arith.constant 0 : index
    %23 = vector.load %arg4[%c0_26, %c0_27, %c0_28, %c0_29] : memref<3x3x4x4xf32, #tpu.memory_space<vmem>>, vector<1x1x4x4xf32>
    %24 = vector.shape_cast %23 : vector<1x1x4x4xf32> to vector<4x4xf32>
    %cst_30 = arith.constant dense<0.000000e+00> : vector<4x256xf32>
    %25 = tpu.matmul %24, %22, %cst_30 {dimension_numbers = #tpu.dot_dimension_numbers<[1], [0], [0], [1], [0, 0, 1, 1], [], []>} : vector<4x4xf32>, vector<4x256xf32>, vector<4x256xf32> -> vector<4x256xf32>
    %26 = arith.addf %18, %25 : vector<4x256xf32>
    %c16_i32 = arith.constant 16 : i32
    %27 = tpu.dynamic_rotate %17 by %c16_i32 dim 1 : vector<4x256xf32>, i32 -> vector<4x256xf32>
    %28 = vector.extract_strided_slice %10 {offsets = [1, 0], sizes = [1, 256], strides = [1, 1]} : vector<9x256xf32> to vector<1x256xf32>
    %29 = vector.broadcast %28 : vector<1x256xf32> to vector<4x256xf32>
    %30 = arith.mulf %27, %29 : vector<4x256xf32>
    %c0_31 = arith.constant 0 : index
    %c1 = arith.constant 1 : index
    %c0_32 = arith.constant 0 : index
    %c0_33 = arith.constant 0 : index
    %31 = vector.load %arg4[%c0_31, %c1, %c0_32, %c0_33] : memref<3x3x4x4xf32, #tpu.memory_space<vmem>>, vector<1x1x4x4xf32>
    %32 = vector.shape_cast %31 : vector<1x1x4x4xf32> to vector<4x4xf32>
    %cst_34 = arith.constant dense<0.000000e+00> : vector<4x256xf32>
    %33 = tpu.matmul %32, %30, %cst_34 {dimension_numbers = #tpu.dot_dimension_numbers<[1], [0], [0], [1], [0, 0, 1, 1], [], []>} : vector<4x4xf32>, vector<4x256xf32>, vector<4x256xf32> -> vector<4x256xf32>
    %34 = arith.addf %26, %33 : vector<4x256xf32>
    %c15_i32 = arith.constant 15 : i32
    %35 = tpu.dynamic_rotate %17 by %c15_i32 dim 1 : vector<4x256xf32>, i32 -> vector<4x256xf32>
    %36 = vector.extract_strided_slice %10 {offsets = [2, 0], sizes = [1, 256], strides = [1, 1]} : vector<9x256xf32> to vector<1x256xf32>
    %37 = vector.broadcast %36 : vector<1x256xf32> to vector<4x256xf32>
    %38 = arith.mulf %35, %37 : vector<4x256xf32>
    %c0_35 = arith.constant 0 : index
    %c2 = arith.constant 2 : index
    %c0_36 = arith.constant 0 : index
    %c0_37 = arith.constant 0 : index
    %39 = vector.load %arg4[%c0_35, %c2, %c0_36, %c0_37] : memref<3x3x4x4xf32, #tpu.memory_space<vmem>>, vector<1x1x4x4xf32>
    %40 = vector.shape_cast %39 : vector<1x1x4x4xf32> to vector<4x4xf32>
    %cst_38 = arith.constant dense<0.000000e+00> : vector<4x256xf32>
    %41 = tpu.matmul %40, %38, %cst_38 {dimension_numbers = #tpu.dot_dimension_numbers<[1], [0], [0], [1], [0, 0, 1, 1], [], []>} : vector<4x4xf32>, vector<4x256xf32>, vector<4x256xf32> -> vector<4x256xf32>
    %42 = arith.addf %34, %41 : vector<4x256xf32>
    %c1_i32 = arith.constant 1 : i32
    %43 = tpu.dynamic_rotate %17 by %c1_i32 dim 1 : vector<4x256xf32>, i32 -> vector<4x256xf32>
    %44 = vector.extract_strided_slice %10 {offsets = [3, 0], sizes = [1, 256], strides = [1, 1]} : vector<9x256xf32> to vector<1x256xf32>
    %45 = vector.broadcast %44 : vector<1x256xf32> to vector<4x256xf32>
    %46 = arith.mulf %43, %45 : vector<4x256xf32>
    %c1_39 = arith.constant 1 : index
    %c0_40 = arith.constant 0 : index
    %c0_41 = arith.constant 0 : index
    %c0_42 = arith.constant 0 : index
    %47 = vector.load %arg4[%c1_39, %c0_40, %c0_41, %c0_42] : memref<3x3x4x4xf32, #tpu.memory_space<vmem>>, vector<1x1x4x4xf32>
    %48 = vector.shape_cast %47 : vector<1x1x4x4xf32> to vector<4x4xf32>
    %cst_43 = arith.constant dense<0.000000e+00> : vector<4x256xf32>
    %49 = tpu.matmul %48, %46, %cst_43 {dimension_numbers = #tpu.dot_dimension_numbers<[1], [0], [0], [1], [0, 0, 1, 1], [], []>} : vector<4x4xf32>, vector<4x256xf32>, vector<4x256xf32> -> vector<4x256xf32>
    %50 = arith.addf %42, %49 : vector<4x256xf32>
    %c1_44 = arith.constant 1 : index
    %c1_45 = arith.constant 1 : index
    %c0_46 = arith.constant 0 : index
    %c0_47 = arith.constant 0 : index
    %51 = vector.load %arg4[%c1_44, %c1_45, %c0_46, %c0_47] : memref<3x3x4x4xf32, #tpu.memory_space<vmem>>, vector<1x1x4x4xf32>
    %52 = vector.shape_cast %51 : vector<1x1x4x4xf32> to vector<4x4xf32>
    %cst_48 = arith.constant dense<0.000000e+00> : vector<4x256xf32>
    %53 = tpu.matmul %52, %17, %cst_48 {dimension_numbers = #tpu.dot_dimension_numbers<[1], [0], [0], [1], [0, 0, 1, 1], [], []>} : vector<4x4xf32>, vector<4x256xf32>, vector<4x256xf32> -> vector<4x256xf32>
    %54 = arith.addf %50, %53 : vector<4x256xf32>
    %c255_i32 = arith.constant 255 : i32
    %55 = tpu.dynamic_rotate %17 by %c255_i32 dim 1 : vector<4x256xf32>, i32 -> vector<4x256xf32>
    %56 = vector.extract_strided_slice %10 {offsets = [5, 0], sizes = [1, 256], strides = [1, 1]} : vector<9x256xf32> to vector<1x256xf32>
    %57 = vector.broadcast %56 : vector<1x256xf32> to vector<4x256xf32>
    %58 = arith.mulf %55, %57 : vector<4x256xf32>
    %c1_49 = arith.constant 1 : index
    %c2_50 = arith.constant 2 : index
    %c0_51 = arith.constant 0 : index
    %c0_52 = arith.constant 0 : index
    %59 = vector.load %arg4[%c1_49, %c2_50, %c0_51, %c0_52] : memref<3x3x4x4xf32, #tpu.memory_space<vmem>>, vector<1x1x4x4xf32>
    %60 = vector.shape_cast %59 : vector<1x1x4x4xf32> to vector<4x4xf32>
    %cst_53 = arith.constant dense<0.000000e+00> : vector<4x256xf32>
    %61 = tpu.matmul %60, %58, %cst_53 {dimension_numbers = #tpu.dot_dimension_numbers<[1], [0], [0], [1], [0, 0, 1, 1], [], []>} : vector<4x4xf32>, vector<4x256xf32>, vector<4x256xf32> -> vector<4x256xf32>
    %62 = arith.addf %54, %61 : vector<4x256xf32>
    %c241_i32 = arith.constant 241 : i32
    %63 = tpu.dynamic_rotate %17 by %c241_i32 dim 1 : vector<4x256xf32>, i32 -> vector<4x256xf32>
    %64 = vector.extract_strided_slice %10 {offsets = [6, 0], sizes = [1, 256], strides = [1, 1]} : vector<9x256xf32> to vector<1x256xf32>
    %65 = vector.broadcast %64 : vector<1x256xf32> to vector<4x256xf32>
    %66 = arith.mulf %63, %65 : vector<4x256xf32>
    %c2_54 = arith.constant 2 : index
    %c0_55 = arith.constant 0 : index
    %c0_56 = arith.constant 0 : index
    %c0_57 = arith.constant 0 : index
    %67 = vector.load %arg4[%c2_54, %c0_55, %c0_56, %c0_57] : memref<3x3x4x4xf32, #tpu.memory_space<vmem>>, vector<1x1x4x4xf32>
    %68 = vector.shape_cast %67 : vector<1x1x4x4xf32> to vector<4x4xf32>
    %cst_58 = arith.constant dense<0.000000e+00> : vector<4x256xf32>
    %69 = tpu.matmul %68, %66, %cst_58 {dimension_numbers = #tpu.dot_dimension_numbers<[1], [0], [0], [1], [0, 0, 1, 1], [], []>} : vector<4x4xf32>, vector<4x256xf32>, vector<4x256xf32> -> vector<4x256xf32>
    %70 = arith.addf %62, %69 : vector<4x256xf32>
    %c240_i32 = arith.constant 240 : i32
    %71 = tpu.dynamic_rotate %17 by %c240_i32 dim 1 : vector<4x256xf32>, i32 -> vector<4x256xf32>
    %72 = vector.extract_strided_slice %10 {offsets = [7, 0], sizes = [1, 256], strides = [1, 1]} : vector<9x256xf32> to vector<1x256xf32>
    %73 = vector.broadcast %72 : vector<1x256xf32> to vector<4x256xf32>
    %74 = arith.mulf %71, %73 : vector<4x256xf32>
    %c2_59 = arith.constant 2 : index
    %c1_60 = arith.constant 1 : index
    %c0_61 = arith.constant 0 : index
    %c0_62 = arith.constant 0 : index
    %75 = vector.load %arg4[%c2_59, %c1_60, %c0_61, %c0_62] : memref<3x3x4x4xf32, #tpu.memory_space<vmem>>, vector<1x1x4x4xf32>
    %76 = vector.shape_cast %75 : vector<1x1x4x4xf32> to vector<4x4xf32>
    %cst_63 = arith.constant dense<0.000000e+00> : vector<4x256xf32>
    %77 = tpu.matmul %76, %74, %cst_63 {dimension_numbers = #tpu.dot_dimension_numbers<[1], [0], [0], [1], [0, 0, 1, 1], [], []>} : vector<4x4xf32>, vector<4x256xf32>, vector<4x256xf32> -> vector<4x256xf32>
    %78 = arith.addf %70, %77 : vector<4x256xf32>
    %c239_i32 = arith.constant 239 : i32
    %79 = tpu.dynamic_rotate %17 by %c239_i32 dim 1 : vector<4x256xf32>, i32 -> vector<4x256xf32>
    %80 = vector.extract_strided_slice %10 {offsets = [8, 0], sizes = [1, 256], strides = [1, 1]} : vector<9x256xf32> to vector<1x256xf32>
    %81 = vector.broadcast %80 : vector<1x256xf32> to vector<4x256xf32>
    %82 = arith.mulf %79, %81 : vector<4x256xf32>
    %c2_64 = arith.constant 2 : index
    %c2_65 = arith.constant 2 : index
    %c0_66 = arith.constant 0 : index
    %c0_67 = arith.constant 0 : index
    %83 = vector.load %arg4[%c2_64, %c2_65, %c0_66, %c0_67] : memref<3x3x4x4xf32, #tpu.memory_space<vmem>>, vector<1x1x4x4xf32>
    %84 = vector.shape_cast %83 : vector<1x1x4x4xf32> to vector<4x4xf32>
    %cst_68 = arith.constant dense<0.000000e+00> : vector<4x256xf32>
    %85 = tpu.matmul %84, %82, %cst_68 {dimension_numbers = #tpu.dot_dimension_numbers<[1], [0], [0], [1], [0, 0, 1, 1], [], []>} : vector<4x4xf32>, vector<4x256xf32>, vector<4x256xf32> -> vector<4x256xf32>
    %86 = arith.addf %78, %85 : vector<4x256xf32>
    %87 = vector.broadcast %2 : vector<4x1xf32> to vector<4x256xf32>
    %88 = arith.addf %86, %87 : vector<4x256xf32>
    %cst_69 = arith.constant 0.000000e+00 : f32
    %89 = vector.broadcast %cst_69 : f32 to vector<4x256xf32>
    %90 = arith.maximumf %88, %89 : vector<4x256xf32>
    %cst_70 = arith.constant dense<0.000000e+00> : vector<16x256xf32>
    %91 = tpu.matmul %3, %90, %cst_70 {dimension_numbers = #tpu.dot_dimension_numbers<[1], [0], [0], [1], [0, 0, 1, 1], [], []>} : vector<16x4xf32>, vector<4x256xf32>, vector<16x256xf32> -> vector<16x256xf32>
    %92 = vector.broadcast %4 : vector<16x1xf32> to vector<16x256xf32>
    %93 = arith.addf %91, %92 : vector<16x256xf32>
    %cst_71 = arith.constant dense<0.000000e+00> : vector<16xf32>
    %94 = vector.multi_reduction <add>, %93, %cst_71 [1] : vector<16x256xf32> to vector<16xf32>
    %95 = vector.shape_cast %94 : vector<16xf32> to vector<16x1xf32>
    %cst_72 = arith.constant 2.560000e+02 : f32
    %96 = vector.broadcast %cst_72 : f32 to vector<16x1xf32>
    %97 = arith.divf %95, %96 : vector<16x1xf32>
    %cst_73 = arith.constant dense<0xFF800000> : vector<16xf32>
    %98 = vector.multi_reduction <maximumf>, %93, %cst_73 [1] : vector<16x256xf32> to vector<16xf32>
    %99 = vector.shape_cast %98 : vector<16xf32> to vector<16x1xf32>
    %100 = tpu.iota {dimensions = array<i32: 1>} : vector<16x2xi32>
    %c0_i32 = arith.constant 0 : i32
    %101 = vector.broadcast %c0_i32 : i32 to vector<16x2xi32>
    %102 = arith.cmpi eq, %100, %101 : vector<16x2xi32>
    %103 = vector.shape_cast %97 : vector<16x1xf32> to vector<16x1xf32>
    %104 = vector.broadcast %103 : vector<16x1xf32> to vector<16x2xf32>
    %105 = vector.shape_cast %99 : vector<16x1xf32> to vector<16x1xf32>
    %106 = vector.broadcast %105 : vector<16x1xf32> to vector<16x2xf32>
    %107 = arith.select %102, %104, %106 : vector<16x2xi1>, vector<16x2xf32>
    %cst_74 = arith.constant dense<0.000000e+00> : vector<8x2xf32>
    %108 = tpu.matmul %5, %107, %cst_74 {dimension_numbers = #tpu.dot_dimension_numbers<[1], [0], [0], [1], [0, 0, 1, 1], [], []>} : vector<8x16xf32>, vector<16x2xf32>, vector<8x2xf32> -> vector<8x2xf32>
    %109 = vector.broadcast %6 : vector<8x1xf32> to vector<8x2xf32>
    %110 = arith.addf %108, %109 : vector<8x2xf32>
    %cst_75 = arith.constant 0.000000e+00 : f32
    %111 = vector.broadcast %cst_75 : f32 to vector<8x2xf32>
    %112 = arith.maximumf %110, %111 : vector<8x2xf32>
    %cst_76 = arith.constant dense<0.000000e+00> : vector<16x2xf32>
    %113 = tpu.matmul %7, %112, %cst_76 {dimension_numbers = #tpu.dot_dimension_numbers<[1], [0], [0], [1], [0, 0, 1, 1], [], []>} : vector<16x8xf32>, vector<8x2xf32>, vector<16x2xf32> -> vector<16x2xf32>
    %114 = vector.broadcast %8 : vector<16x1xf32> to vector<16x2xf32>
    %115 = arith.addf %113, %114 : vector<16x2xf32>
    %cst_77 = arith.constant dense<0.000000e+00> : vector<16xf32>
    %116 = vector.multi_reduction <add>, %115, %cst_77 [1] : vector<16x2xf32> to vector<16xf32>
    %117 = vector.shape_cast %116 : vector<16xf32> to vector<16x1xf32>
    %118 = arith.negf %117 : vector<16x1xf32>
    %119 = math.exp %118 : vector<16x1xf32>
    %cst_78 = arith.constant 1.000000e+00 : f32
    %120 = vector.broadcast %cst_78 : f32 to vector<16x1xf32>
    %121 = arith.addf %120, %119 : vector<16x1xf32>
    %122 = arith.divf %120, %121 : vector<16x1xf32>
    %123 = vector.broadcast %122 : vector<16x1xf32> to vector<16x256xf32>
    %124 = arith.mulf %93, %123 : vector<16x256xf32>
    %cst_79 = arith.constant dense<0xFF800000> : vector<256xf32>
    %125 = vector.multi_reduction <maximumf>, %124, %cst_79 [0] : vector<16x256xf32> to vector<256xf32>
    %126 = vector.shape_cast %125 : vector<256xf32> to vector<1x256xf32>
    %cst_80 = arith.constant dense<0.000000e+00> : vector<256xf32>
    %127 = vector.multi_reduction <add>, %124, %cst_80 [0] : vector<16x256xf32> to vector<256xf32>
    %128 = vector.shape_cast %127 : vector<256xf32> to vector<1x256xf32>
    %cst_81 = arith.constant 1.600000e+01 : f32
    %129 = vector.broadcast %cst_81 : f32 to vector<1x256xf32>
    %130 = arith.divf %128, %129 : vector<1x256xf32>
    %131 = vector.extract_strided_slice %9 {offsets = [0, 0], sizes = [1, 1], strides = [1, 1]} : vector<1x2xf32> to vector<1x1xf32>
    %132 = vector.broadcast %131 : vector<1x1xf32> to vector<1x256xf32>
    %133 = arith.mulf %126, %132 : vector<1x256xf32>
    %134 = vector.extract_strided_slice %9 {offsets = [0, 1], sizes = [1, 1], strides = [1, 1]} : vector<1x2xf32> to vector<1x1xf32>
    %135 = vector.broadcast %134 : vector<1x1xf32> to vector<1x256xf32>
    %136 = arith.mulf %130, %135 : vector<1x256xf32>
    %137 = arith.addf %133, %136 : vector<1x256xf32>
    %138 = arith.negf %137 : vector<1x256xf32>
    %139 = math.exp %138 : vector<1x256xf32>
    %cst_82 = arith.constant 1.000000e+00 : f32
    %140 = vector.broadcast %cst_82 : f32 to vector<1x256xf32>
    %141 = arith.addf %140, %139 : vector<1x256xf32>
    %142 = arith.divf %140, %141 : vector<1x256xf32>
    %143 = vector.broadcast %142 : vector<1x256xf32> to vector<16x256xf32>
    %144 = arith.mulf %124, %143 : vector<16x256xf32>
    %145 = arith.addf %144, %12 : vector<16x256xf32>
    %cst_83 = arith.constant 0.000000e+00 : f32
    %146 = vector.broadcast %cst_83 : f32 to vector<16x256xf32>
    %147 = arith.maximumf %145, %146 : vector<16x256xf32>
    %c0_84 = arith.constant 0 : index
    %c0_85 = arith.constant 0 : index
    %c0_86 = arith.constant 0 : index
    %148 = vector.load %arg14[%c0_84, %c0_85, %c0_86] : memref<1x16x256xf32, #tpu.memory_space<vmem>>, vector<1x16x256xf32>
    %149 = vector.shape_cast %148 : vector<1x16x256xf32> to vector<16x256xf32>
    %150 = vector.shape_cast %147 : vector<16x256xf32> to vector<1x16x256xf32>
    tpu.vector_store %arg14[%c0_84, %c0_85, %c0_86], %150 {strides = array<i32>} : memref<1x16x256xf32, #tpu.memory_space<vmem>>, vector<1x16x256xf32>,
    return
  }
  func.func @transform_0(%arg0: i32) -> (i32, i32, i32) {
    %c0_i32 = arith.constant 0 : i32
    %c0_i32_0 = arith.constant 0 : i32
    %c0_i32_1 = arith.constant 0 : i32
    return %arg0, %c0_i32, %c0_i32_0 : i32, i32, i32
  }
  func.func @transform_1(%arg0: i32) -> (i32, i32) {
    %c0_i32 = arith.constant 0 : i32
    %c0_i32_0 = arith.constant 0 : i32
    %c0_i32_1 = arith.constant 0 : i32
    return %c0_i32, %c0_i32_0 : i32, i32
  }
  func.func @transform_2(%arg0: i32) -> (i32, i32) {
    %c0_i32 = arith.constant 0 : i32
    %c0_i32_0 = arith.constant 0 : i32
    %c0_i32_1 = arith.constant 0 : i32
    return %c0_i32, %c0_i32_0 : i32, i32
  }
  func.func @transform_3(%arg0: i32) -> (i32, i32, i32, i32) {
    %c0_i32 = arith.constant 0 : i32
    %c0_i32_0 = arith.constant 0 : i32
    %c0_i32_1 = arith.constant 0 : i32
    %c0_i32_2 = arith.constant 0 : i32
    %c0_i32_3 = arith.constant 0 : i32
    return %c0_i32, %c0_i32_0, %c0_i32_1, %c0_i32_2 : i32, i32, i32, i32
  }
  func.func @transform_4(%arg0: i32) -> (i32, i32) {
    %c0_i32 = arith.constant 0 : i32
    %c0_i32_0 = arith.constant 0 : i32
    %c0_i32_1 = arith.constant 0 : i32
    return %c0_i32, %c0_i32_0 : i32, i32
  }
  func.func @transform_5(%arg0: i32) -> (i32, i32) {
    %c0_i32 = arith.constant 0 : i32
    %c0_i32_0 = arith.constant 0 : i32
    %c0_i32_1 = arith.constant 0 : i32
    return %c0_i32, %c0_i32_0 : i32, i32
  }
  func.func @transform_6(%arg0: i32) -> (i32, i32) {
    %c0_i32 = arith.constant 0 : i32
    %c0_i32_0 = arith.constant 0 : i32
    %c0_i32_1 = arith.constant 0 : i32
    return %c0_i32, %c0_i32_0 : i32, i32
  }
  func.func @transform_7(%arg0: i32) -> (i32, i32) {
    %c0_i32 = arith.constant 0 : i32
    %c0_i32_0 = arith.constant 0 : i32
    %c0_i32_1 = arith.constant 0 : i32
    return %c0_i32, %c0_i32_0 : i32, i32
  }
  func.func @transform_8(%arg0: i32) -> (i32, i32) {
    %c0_i32 = arith.constant 0 : i32
    %c0_i32_0 = arith.constant 0 : i32
    %c0_i32_1 = arith.constant 0 : i32
    return %c0_i32, %c0_i32_0 : i32, i32
  }
  func.func @transform_9(%arg0: i32) -> (i32, i32) {
    %c0_i32 = arith.constant 0 : i32
    %c0_i32_0 = arith.constant 0 : i32
    %c0_i32_1 = arith.constant 0 : i32
    return %c0_i32, %c0_i32_0 : i32, i32
  }
  func.func @transform_10(%arg0: i32) -> (i32, i32) {
    %c0_i32 = arith.constant 0 : i32
    %c0_i32_0 = arith.constant 0 : i32
    %c0_i32_1 = arith.constant 0 : i32
    return %c0_i32, %c0_i32_0 : i32, i32
  }
  func.func @transform_11(%arg0: i32) -> (i32, i32) {
    %c0_i32 = arith.constant 0 : i32
    %c0_i32_0 = arith.constant 0 : i32
    %c0_i32_1 = arith.constant 0 : i32
    return %c0_i32, %c0_i32_0 : i32, i32
  }
  func.func @transform_12(%arg0: i32) -> (i32, i32) {
    %c0_i32 = arith.constant 0 : i32
    %c0_i32_0 = arith.constant 0 : i32
    %c0_i32_1 = arith.constant 0 : i32
    return %c0_i32, %c0_i32_0 : i32, i32
  }
  func.func @transform_13(%arg0: i32) -> (i32, i32, i32) {
    %c0_i32 = arith.constant 0 : i32
    %c0_i32_0 = arith.constant 0 : i32
    %c0_i32_1 = arith.constant 0 : i32
    return %arg0, %c0_i32, %c0_i32_0 : i32, i32, i32
  }
}

</mosaic_0001>

<llo_original>
// kernel: tpu_custom_call.1
$region0: #{tpu_custom_call.1}
  #allocation0 [shape = 'u32[]', space=smem, size = 0x4, offset = 0x4, fixed_abs, tag = 'smem constant byte address 0x4 - core index']
  #allocation1 [shape = 'u32[144,128]{1,0:T(1,128)}', space=vmem, size = 0x12000, scoped, tag = 'internal scratch']
  %s0 = inlined_call_operand.vmem [shape: f32[2,16,256], index: 0, kind: input, shape index: {}]
  %s1 = inlined_call_operand.hbm [shape: f32[4,16], index: 1, kind: input, shape index: {}]
  %s2 = inlined_call_operand.vmem [shape: f32[4,1], index: 2, kind: input, shape index: {}]
  %s3 = inlined_call_operand.vmem [shape: f32[3,3,4,4], index: 3, kind: input, shape index: {}]
  %s4 = inlined_call_operand.vmem [shape: f32[4,1], index: 4, kind: input, shape index: {}]
  %s5 = inlined_call_operand.vmem [shape: f32[16,4], index: 5, kind: input, shape index: {}]
  %s6 = inlined_call_operand.vmem [shape: f32[16,1], index: 6, kind: input, shape index: {}]
  %s7 = inlined_call_operand.hbm [shape: f32[8,16], index: 7, kind: input, shape index: {}]
  %s8 = inlined_call_operand.vmem [shape: f32[8,1], index: 8, kind: input, shape index: {}]
  %s9 = inlined_call_operand.vmem [shape: f32[16,8], index: 9, kind: input, shape index: {}]
  %s10 = inlined_call_operand.vmem [shape: f32[16,1], index: 10, kind: input, shape index: {}]
  %s11 = inlined_call_operand.vmem [shape: f32[1,2], index: 11, kind: input, shape index: {}]
  %s12 = inlined_call_operand.vmem [shape: f32[9,256], index: 12, kind: input, shape index: {}]
  %s13 = inlined_call_operand.hbm [shape: f32[2,16,256], index: 13, kind: output, shape index: {}]
  %s14 = sld [smem:[#allocation0]]
  $region93: #{tpu_custom_call.1} parent=0
    _
  %s16 = ssub.s32 1, %s14
  %s17 = scalar_select 0, %s16, %s14
  $region1: #{tpu_custom_call.1} parent=0
    #allocation2 [shape = 'u8[2048]{0}', space=vmem, size = 0x800, scoped, tag = 'input window, operand 1, single buffered']
    #allocation3 [shape = 's32[2]{0}', space=sflag, size = 0x8, scoped, tag = 'scoped memory for tpu_custom_call.1']
    #allocation4 [shape = 's32[2]{0}', space=sflag, size = 0x8, scoped, tag = 'scoped memory for tpu_custom_call.1']
    #allocation5 [shape = 'u8[4096]{0}', space=vmem, size = 0x1000, scoped, tag = 'input window, operand 7, single buffered']
    #allocation6 [shape = 's32[1]{0}', space=sflag, size = 0x4, scoped, tag = 'scoped memory for tpu_custom_call.1']
    #allocation7 [shape = 'u8[32768]{0}', space=vmem, size = 0x8000, scoped, tag = 'output window, operand 0']
    %18 = vsyncpa [#allocation3], 0
    %19 = vsyncpa [#allocation6], 0
    %20 = vsyncpa [#allocation4], 0
    %s21 = scalar_lea.sflag [#allocation4], 1
    %22 = vsyncpa %s21, 0
    loop: start=0, step=1, limit=4
    $region2: #{tpu_custom_call.1} parent=1 // loop_pre_header
      _
    $region3: #{tpu_custom_call.1} parent=1 // loop_header
      %s24 = sphi 0, %s28
      %p25 = scmp.ge.s32.totalorder %s24, 4
      %s34 = sphi 0, %s36
      %s37 = sphi 0, %s34
      %s38 = sphi 0, %s37
      %s54 = sphi 0, %s38
      %s58 = sphi 0, %s58
      %s60 = sphi 0, %s58
      %s61 = sphi 0, %s60
      %s75 = sphi 0, %s61
      %s79 = sphi 0, %s79
      %s81 = sphi 0, %s79
      %s82 = sphi 0, %s81
      %s96 = sphi 0, %s82
      %s100 = sphi 0, %s100
      %s102 = sphi 0, %s100
      %s103 = sphi 0, %s102
      %s117 = sphi 0, %s103
      %s121 = sphi 0, %s121
      %s123 = sphi 0, %s121
      %s124 = sphi 0, %s123
      %s138 = sphi 0, %s124
      %s142 = sphi 0, %s142
      %s144 = sphi 0, %s142
      %s145 = sphi 0, %s144
      %s159 = sphi 0, %s145
      %s163 = sphi 0, %s163
      %s165 = sphi 0, %s163
      %s166 = sphi 0, %s165
      %s180 = sphi 0, %s166
      %s184 = sphi 0, %s184
      %s186 = sphi 0, %s184
      %s187 = sphi 0, %s186
      %s201 = sphi 0, %s187
      %s205 = sphi 0, %s205
      %s207 = sphi 0, %s205
      %s208 = sphi 0, %s207
      %s222 = sphi 0, %s208
      %s226 = sphi 0, %s226
      %s228 = sphi 0, %s226
      %s229 = sphi 0, %s228
      %s243 = sphi 0, %s229
      %s247 = sphi 0, %s247
      %s249 = sphi 0, %s247
      %s250 = sphi 0, %s249
      %s264 = sphi 0, %s250
      %s268 = sphi 0, %s268
      %s270 = sphi 0, %s268
      %s271 = sphi 0, %s270
      %s285 = sphi 0, %s271
      %s289 = sphi 0, %s289
      %s291 = sphi 0, %s289
      %s292 = sphi 0, %s291
      %s306 = sphi 0, %s292
      %s312 = sphi 0, %s314
      %s315 = sphi 0, %s312
      %s316 = sphi 0, %s315
      %s332 = sphi 0, %s316
    $region4: #{tpu_custom_call.1} parent=1 // loop_header_branch
      %27 = sbr.rel (%p25) target = $region8
    $region5: #{tpu_custom_call.1} parent=1 // loop_body
      %s29 = ssub.s32 %s24, 1
      %s30 = ssub.s32 %s24, 2
      %s31 = sadd.s32 %s24, 1
      %s32 = ssub.s32 %s24, %s31
      %p33 = scmp.eq.s32.totalorder %s32, 0
      %s35 = sadd.s32 %s34, 1
      %s36 = scalar_select %p33, %s34, %s35
      %p39 = pneg %p33
      %p40 = scmp.eq.s32.totalorder %s24, 1
      %p41 = por %p39, %p40
      %p42 = scmp.ne.s32.totalorder %s34, %s37
      %p43 = scmp.eq.s32.totalorder %s24, 0
      %p44 = por %p42, %p43
      %p45 = scmp.ne.s32.totalorder %s34, %s37
      %p46 = scmp.eq.s32.totalorder %s29, 1
      %p47 = por %p45, %p46
      %p48 = scmp.ne.s32.totalorder %s37, %s38
      %p49 = scmp.eq.s32.totalorder %s29, 0
      %p50 = por %p48, %p49
      %p51 = scmp.ne.s32.totalorder %s37, %s38
      %p52 = scmp.eq.s32.totalorder %s30, 1
      %p53 = por %p51, %p52
      %p55 = scmp.ne.s32.totalorder %s38, %s54
      %p56 = scmp.eq.s32.totalorder %s30, 0
      %p57 = por %p55, %p56
      %s59 = sadd.s32 %s58, 1
      %p62 = scmp.eq.s32.totalorder %s24, 1
      %p63 = scmp.ne.s32.totalorder %s58, %s60
      %p64 = scmp.eq.s32.totalorder %s24, 0
      %p65 = por %p63, %p64
      %p66 = scmp.ne.s32.totalorder %s58, %s60
      %p67 = scmp.eq.s32.totalorder %s29, 1
      %p68 = por %p66, %p67
      %p69 = scmp.ne.s32.totalorder %s60, %s61
      %p70 = scmp.eq.s32.totalorder %s29, 0
      %p71 = por %p69, %p70
      %p72 = scmp.ne.s32.totalorder %s60, %s61
      %p73 = scmp.eq.s32.totalorder %s30, 1
      %p74 = por %p72, %p73
      %p76 = scmp.ne.s32.totalorder %s61, %s75
      %p77 = scmp.eq.s32.totalorder %s30, 0
      %p78 = por %p76, %p77
      %s80 = sadd.s32 %s79, 1
      %p83 = scmp.eq.s32.totalorder %s24, 1
      %p84 = scmp.ne.s32.totalorder %s79, %s81
      %p85 = scmp.eq.s32.totalorder %s24, 0
      %p86 = por %p84, %p85
      %p87 = scmp.ne.s32.totalorder %s79, %s81
      %p88 = scmp.eq.s32.totalorder %s29, 1
      %p89 = por %p87, %p88
      %p90 = scmp.ne.s32.totalorder %s81, %s82
      %p91 = scmp.eq.s32.totalorder %s29, 0
      %p92 = por %p90, %p91
      %p93 = scmp.ne.s32.totalorder %s81, %s82
      %p94 = scmp.eq.s32.totalorder %s30, 1
      %p95 = por %p93, %p94
      %p97 = scmp.ne.s32.totalorder %s82, %s96
      %p98 = scmp.eq.s32.totalorder %s30, 0
      %p99 = por %p97, %p98
      %s101 = sadd.s32 %s100, 1
      %p104 = scmp.eq.s32.totalorder %s24, 1
      %p105 = scmp.ne.s32.totalorder %s100, %s102
      %p106 = scmp.eq.s32.totalorder %s24, 0
      %p107 = por %p105, %p106
      %p108 = scmp.ne.s32.totalorder %s100, %s102
      %p109 = scmp.eq.s32.totalorder %s29, 1
      %p110 = por %p108, %p109
      %p111 = scmp.ne.s32.totalorder %s102, %s103
      %p112 = scmp.eq.s32.totalorder %s29, 0
      %p113 = por %p111, %p112
      %p114 = scmp.ne.s32.totalorder %s102, %s103
      %p115 = scmp.eq.s32.totalorder %s30, 1
      %p116 = por %p114, %p115
      %p118 = scmp.ne.s32.totalorder %s103, %s117
      %p119 = scmp.eq.s32.totalorder %s30, 0
      %p120 = por %p118, %p119
      %s122 = sadd.s32 %s121, 1
      %p125 = scmp.eq.s32.totalorder %s24, 1
      %p126 = scmp.ne.s32.totalorder %s121, %s123
      %p127 = scmp.eq.s32.totalorder %s24, 0
      %p128 = por %p126, %p127
      %p129 = scmp.ne.s32.totalorder %s121, %s123
      %p130 = scmp.eq.s32.totalorder %s29, 1
      %p131 = por %p129, %p130
      %p132 = scmp.ne.s32.totalorder %s123, %s124
      %p133 = scmp.eq.s32.totalorder %s29, 0
      %p134 = por %p132, %p133
      %p135 = scmp.ne.s32.totalorder %s123, %s124
      %p136 = scmp.eq.s32.totalorder %s30, 1
      %p137 = por %p135, %p136
      %p139 = scmp.ne.s32.totalorder %s124, %s138
      %p140 = scmp.eq.s32.totalorder %s30, 0
      %p141 = por %p139, %p140
      %s143 = sadd.s32 %s142, 1
      %p146 = scmp.eq.s32.totalorder %s24, 1
      %p147 = scmp.ne.s32.totalorder %s142, %s144
      %p148 = scmp.eq.s32.totalorder %s24, 0
      %p149 = por %p147, %p148
      %p150 = scmp.ne.s32.totalorder %s142, %s144
      %p151 = scmp.eq.s32.totalorder %s29, 1
      %p152 = por %p150, %p151
      %p153 = scmp.ne.s32.totalorder %s144, %s145
      %p154 = scmp.eq.s32.totalorder %s29, 0
      %p155 = por %p153, %p154
      %p156 = scmp.ne.s32.totalorder %s144, %s145
      %p157 = scmp.eq.s32.totalorder %s30, 1
      %p158 = por %p156, %p157
      %p160 = scmp.ne.s32.totalorder %s145, %s159
      %p161 = scmp.eq.s32.totalorder %s30, 0
      %p162 = por %p160, %p161
      %s164 = sadd.s32 %s163, 1
      %p167 = scmp.eq.s32.totalorder %s24, 1
      %p168 = scmp.ne.s32.totalorder %s163, %s165
      %p169 = scmp.eq.s32.totalorder %s24, 0
      %p170 = por %p168, %p169
      %p171 = scmp.ne.s32.totalorder %s163, %s165
      %p172 = scmp.eq.s32.totalorder %s29, 1
      %p173 = por %p171, %p172
      %p174 = scmp.ne.s32.totalorder %s165, %s166
      %p175 = scmp.eq.s32.totalorder %s29, 0
      %p176 = por %p174, %p175
      %p177 = scmp.ne.s32.totalorder %s165, %s166
      %p178 = scmp.eq.s32.totalorder %s30, 1
      %p179 = por %p177, %p178
      %p181 = scmp.ne.s32.totalorder %s166, %s180
      %p182 = scmp.eq.s32.totalorder %s30, 0
      %p183 = por %p181, %p182
      %s185 = sadd.s32 %s184, 1
      %p188 = scmp.eq.s32.totalorder %s24, 1
      %p189 = scmp.ne.s32.totalorder %s184, %s186
      %p190 = scmp.eq.s32.totalorder %s24, 0
      %p191 = por %p189, %p190
      %p192 = scmp.ne.s32.totalorder %s184, %s186
      %p193 = scmp.eq.s32.totalorder %s29, 1
      %p194 = por %p192, %p193
      %p195 = scmp.ne.s32.totalorder %s186, %s187
      %p196 = scmp.eq.s32.totalorder %s29, 0
      %p197 = por %p195, %p196
      %p198 = scmp.ne.s32.totalorder %s186, %s187
      %p199 = scmp.eq.s32.totalorder %s30, 1
      %p200 = por %p198, %p199
      %p202 = scmp.ne.s32.totalorder %s187, %s201
      %p203 = scmp.eq.s32.totalorder %s30, 0
      %p204 = por %p202, %p203
      %s206 = sadd.s32 %s205, 1
      %p209 = scmp.eq.s32.totalorder %s24, 1
      %p210 = scmp.ne.s32.totalorder %s205, %s207
      %p211 = scmp.eq.s32.totalorder %s24, 0
      %p212 = por %p210, %p211
      %p213 = scmp.ne.s32.totalorder %s205, %s207
      %p214 = scmp.eq.s32.totalorder %s29, 1
      %p215 = por %p213, %p214
      %p216 = scmp.ne.s32.totalorder %s207, %s208
      %p217 = scmp.eq.s32.totalorder %s29, 0
      %p218 = por %p216, %p217
      %p219 = scmp.ne.s32.totalorder %s207, %s208
      %p220 = scmp.eq.s32.totalorder %s30, 1
      %p221 = por %p219, %p220
      %p223 = scmp.ne.s32.totalorder %s208, %s222
      %p224 = scmp.eq.s32.totalorder %s30, 0
      %p225 = por %p223, %p224
      %s227 = sadd.s32 %s226, 1
      %p230 = scmp.eq.s32.totalorder %s24, 1
      %p231 = scmp.ne.s32.totalorder %s226, %s228
      %p232 = scmp.eq.s32.totalorder %s24, 0
      %p233 = por %p231, %p232
      %p234 = scmp.ne.s32.totalorder %s226, %s228
      %p235 = scmp.eq.s32.totalorder %s29, 1
      %p236 = por %p234, %p235
      %p237 = scmp.ne.s32.totalorder %s228, %s229
      %p238 = scmp.eq.s32.totalorder %s29, 0
      %p239 = por %p237, %p238
      %p240 = scmp.ne.s32.totalorder %s228, %s229
      %p241 = scmp.eq.s32.totalorder %s30, 1
      %p242 = por %p240, %p241
      %p244 = scmp.ne.s32.totalorder %s229, %s243
      %p245 = scmp.eq.s32.totalorder %s30, 0
      %p246 = por %p244, %p245
      %s248 = sadd.s32 %s247, 1
      %p251 = scmp.eq.s32.totalorder %s24, 1
      %p252 = scmp.ne.s32.totalorder %s247, %s249
      %p253 = scmp.eq.s32.totalorder %s24, 0
      %p254 = por %p252, %p253
      %p255 = scmp.ne.s32.totalorder %s247, %s249
      %p256 = scmp.eq.s32.totalorder %s29, 1
      %p257 = por %p255, %p256
      %p258 = scmp.ne.s32.totalorder %s249, %s250
      %p259 = scmp.eq.s32.totalorder %s29, 0
      %p260 = por %p258, %p259
      %p261 = scmp.ne.s32.totalorder %s249, %s250
      %p262 = scmp.eq.s32.totalorder %s30, 1
      %p263 = por %p261, %p262
      %p265 = scmp.ne.s32.totalorder %s250, %s264
      %p266 = scmp.eq.s32.totalorder %s30, 0
      %p267 = por %p265, %p266
      %s269 = sadd.s32 %s268, 1
      %p272 = scmp.eq.s32.totalorder %s24, 1
      %p273 = scmp.ne.s32.totalorder %s268, %s270
      %p274 = scmp.eq.s32.totalorder %s24, 0
      %p275 = por %p273, %p274
      %p276 = scmp.ne.s32.totalorder %s268, %s270
      %p277 = scmp.eq.s32.totalorder %s29, 1
      %p278 = por %p276, %p277
      %p279 = scmp.ne.s32.totalorder %s270, %s271
      %p280 = scmp.eq.s32.totalorder %s29, 0
      %p281 = por %p279, %p280
      %p282 = scmp.ne.s32.totalorder %s270, %s271
      %p283 = scmp.eq.s32.totalorder %s30, 1
      %p284 = por %p282, %p283
      %p286 = scmp.ne.s32.totalorder %s271, %s285
      %p287 = scmp.eq.s32.totalorder %s30, 0
      %p288 = por %p286, %p287
      %s290 = sadd.s32 %s289, 1
      %p293 = scmp.eq.s32.totalorder %s24, 1
      %p294 = scmp.ne.s32.totalorder %s289, %s291
      %p295 = scmp.eq.s32.totalorder %s24, 0
      %p296 = por %p294, %p295
      %p297 = scmp.ne.s32.totalorder %s289, %s291
      %p298 = scmp.eq.s32.totalorder %s29, 1
      %p299 = por %p297, %p298
      %p300 = scmp.ne.s32.totalorder %s291, %s292
      %p301 = scmp.eq.s32.totalorder %s29, 0
      %p302 = por %p300, %p301
      %p303 = scmp.ne.s32.totalorder %s291, %s292
      %p304 = scmp.eq.s32.totalorder %s30, 1
      %p305 = por %p303, %p304
      %p307 = scmp.ne.s32.totalorder %s292, %s306
      %p308 = scmp.eq.s32.totalorder %s30, 0
      %p309 = por %p307, %p308
      %s310 = ssub.s32 %s24, %s31
      %p311 = scmp.eq.s32.totalorder %s310, 0
      %s313 = sadd.s32 %s312, 1
      %s314 = scalar_select %p311, %s312, %s313
      %p317 = pneg %p311
      %p318 = scmp.eq.s32.totalorder %s24, 1
      %p319 = por %p317, %p318
      %p320 = scmp.ne.s32.totalorder %s312, %s315
      %p321 = scmp.eq.s32.totalorder %s24, 0
      %p322 = por %p320, %p321
      %p323 = scmp.ne.s32.totalorder %s312, %s315
      %p324 = scmp.eq.s32.totalorder %s29, 1
      %p325 = por %p323, %p324
      %p326 = scmp.ne.s32.totalorder %s315, %s316
      %p327 = scmp.eq.s32.totalorder %s29, 0
      %p328 = por %p326, %p327
      %p329 = scmp.ne.s32.totalorder %s315, %s316
      %p330 = scmp.eq.s32.totalorder %s30, 1
      %p331 = por %p329, %p330
      %p333 = scmp.ne.s32.totalorder %s316, %s332
      %p334 = scmp.eq.s32.totalorder %s30, 0
      %p335 = por %p333, %p334
      %p336 = scmp.le.s32.totalorder 1, %s24
      %p337 = scmp.lt.s32.totalorder %s24, 3
      %p338 = pnand %p336, %p337
      %p339 = pneg %p338
      // Predicated region
      $region9: #{tpu_custom_call.1} parent=5 // pred_check
        _
      $region10: #{tpu_custom_call.1} parent=5 // pred_check_branch
        %341 = sbr.rel (%p338) target = $region12
      $region11: #{tpu_custom_call.1} parent=5 // pred_region
        %s342 = ssub.s32 %s24, 1
        // Predicated region
        $region13: #{tpu_custom_call.1} parent=11 // pred_check
          %p343 = pneg %p71
        $region14: #{tpu_custom_call.1} parent=11 // pred_check_branch
          %345 = sbr.rel (%p343) target = $region16
        $region15: #{tpu_custom_call.1} parent=11 // pred_region
          %s347 = ssub.s32 64, 64
          %348 = vsyncadd [#allocation3], %s347
          %s350 = sshll.u32 [#allocation2], 4
          %s351 = int_to_ptr.vmem [resolvable:$true] %s350
          %353 = dma.hbm_to_vmem [thread:$0]  %s1, 64, %s351, [#allocation3]
        $region16: #{tpu_custom_call.1} parent=11 // pred_fallthru
          _
        // Predicated region
        $region17: #{tpu_custom_call.1} parent=11 // pred_check
          %p354 = pneg %p92
        $region18: #{tpu_custom_call.1} parent=11 // pred_check_branch
          %356 = sbr.rel (%p354) target = $region20
        $region19: #{tpu_custom_call.1} parent=11 // pred_region
          _
        $region20: #{tpu_custom_call.1} parent=11 // pred_fallthru
          _
        // Predicated region
        $region21: #{tpu_custom_call.1} parent=11 // pred_check
          %p357 = pneg %p113
        $region22: #{tpu_custom_call.1} parent=11 // pred_check_branch
          %359 = sbr.rel (%p357) target = $region24
        $region23: #{tpu_custom_call.1} parent=11 // pred_region
          _
        $region24: #{tpu_custom_call.1} parent=11 // pred_fallthru
          _
        // Predicated region
        $region25: #{tpu_custom_call.1} parent=11 // pred_check
          %p360 = pneg %p134
        $region26: #{tpu_custom_call.1} parent=11 // pred_check_branch
          %362 = sbr.rel (%p360) target = $region28
        $region27: #{tpu_custom_call.1} parent=11 // pred_region
          _
        $region28: #{tpu_custom_call.1} parent=11 // pred_fallthru
          _
        // Predicated region
        $region29: #{tpu_custom_call.1} parent=11 // pred_check
          %p363 = pneg %p155
        $region30: #{tpu_custom_call.1} parent=11 // pred_check_branch
          %365 = sbr.rel (%p363) target = $region32
        $region31: #{tpu_custom_call.1} parent=11 // pred_region
          _
        $region32: #{tpu_custom_call.1} parent=11 // pred_fallthru
          _
        // Predicated region
        $region33: #{tpu_custom_call.1} parent=11 // pred_check
          %p366 = pneg %p176
        $region34: #{tpu_custom_call.1} parent=11 // pred_check_branch
          %368 = sbr.rel (%p366) target = $region36
        $region35: #{tpu_custom_call.1} parent=11 // pred_region
          _
        $region36: #{tpu_custom_call.1} parent=11 // pred_fallthru
          _
        // Predicated region
        $region37: #{tpu_custom_call.1} parent=11 // pred_check
          %p369 = pneg %p197
        $region38: #{tpu_custom_call.1} parent=11 // pred_check_branch
          %371 = sbr.rel (%p369) target = $region40
        $region39: #{tpu_custom_call.1} parent=11 // pred_region
          %s373 = ssub.s32 128, 128
          %374 = vsyncadd [#allocation6], %s373
          %s376 = sshll.u32 [#allocation5], 4
          %s377 = int_to_ptr.vmem [resolvable:$true] %s376
          %379 = dma.hbm_to_vmem [thread:$0]  %s7, 128, %s377, [#allocation6]
        $region40: #{tpu_custom_call.1} parent=11 // pred_fallthru
          _
        // Predicated region
        $region41: #{tpu_custom_call.1} parent=11 // pred_check
          %p380 = pneg %p218
        $region42: #{tpu_custom_call.1} parent=11 // pred_check_branch
          %382 = sbr.rel (%p380) target = $region44
        $region43: #{tpu_custom_call.1} parent=11 // pred_region
          _
        $region44: #{tpu_custom_call.1} parent=11 // pred_fallthru
          _
        // Predicated region
        $region45: #{tpu_custom_call.1} parent=11 // pred_check
          %p383 = pneg %p239
        $region46: #{tpu_custom_call.1} parent=11 // pred_check_branch
          %385 = sbr.rel (%p383) target = $region48
        $region47: #{tpu_custom_call.1} parent=11 // pred_region
          _
        $region48: #{tpu_custom_call.1} parent=11 // pred_fallthru
          _
        // Predicated region
        $region49: #{tpu_custom_call.1} parent=11 // pred_check
          %p386 = pneg %p260
        $region50: #{tpu_custom_call.1} parent=11 // pred_check_branch
          %388 = sbr.rel (%p386) target = $region52
        $region51: #{tpu_custom_call.1} parent=11 // pred_region
          _
        $region52: #{tpu_custom_call.1} parent=11 // pred_fallthru
          _
        // Predicated region
        $region53: #{tpu_custom_call.1} parent=11 // pred_check
          %p389 = pneg %p281
        $region54: #{tpu_custom_call.1} parent=11 // pred_check_branch
          %391 = sbr.rel (%p389) target = $region56
        $region55: #{tpu_custom_call.1} parent=11 // pred_region
          _
        $region56: #{tpu_custom_call.1} parent=11 // pred_fallthru
          _
        // Predicated region
        $region57: #{tpu_custom_call.1} parent=11 // pred_check
          %p392 = pneg %p302
        $region58: #{tpu_custom_call.1} parent=11 // pred_check_branch
          %394 = sbr.rel (%p392) target = $region60
        $region59: #{tpu_custom_call.1} parent=11 // pred_region
          _
        $region60: #{tpu_custom_call.1} parent=11 // pred_fallthru
          _
      $region12: #{tpu_custom_call.1} parent=5 // pred_fallthru
        _
      %p395 = scmp.lt.s32.totalorder %s24, 2
      // Predicated region
      $region61: #{tpu_custom_call.1} parent=5 // pred_check
        %p396 = pneg %p395
      $region62: #{tpu_custom_call.1} parent=5 // pred_check_branch
        %398 = sbr.rel (%p396) target = $region64
      $region63: #{tpu_custom_call.1} parent=5 // pred_region
        // Predicated region
        $region65: #{tpu_custom_call.1} parent=63 // pred_check
          %p399 = pneg %p44
        $region66: #{tpu_custom_call.1} parent=63 // pred_check_branch
          %401 = sbr.rel (%p399) target = $region68
        $region67: #{tpu_custom_call.1} parent=63 // pred_region
          %p402 = scmp.lt.s32.totalorder %s24, 1
          %s403 = scalar_select %p402, %s24, 1
          %s404 = smul.addr %s403, 4
          %s405 = smul.addr %s404, 8
          %s406 = scalar_lea.vmem %s0, %s405
        $region68: #{tpu_custom_call.1} parent=63 // pred_fallthru
          _
      $region64: #{tpu_custom_call.1} parent=5 // pred_fallthru
        _
      %p407 = scmp.le.s32.totalorder 1, %s24
      %p408 = scmp.lt.s32.totalorder %s24, 3
      %p409 = pnand %p407, %p408
      %p410 = pneg %p409
      // Predicated region
      $region69: #{tpu_custom_call.1} parent=5 // pred_check
        _
      $region70: #{tpu_custom_call.1} parent=5 // pred_check_branch
        %412 = sbr.rel (%p409) target = $region72
      $region71: #{tpu_custom_call.1} parent=5 // pred_region
        %s413 = ssub.s32 %s24, 1
        // Predicated region
        $region73: #{tpu_custom_call.1} parent=71 // pred_check
          %p414 = pneg %p71
        $region74: #{tpu_custom_call.1} parent=71 // pred_check_branch
          %416 = sbr.rel (%p414) target = $region76
        $region75: #{tpu_custom_call.1} parent=71 // pred_region
          %417 = dma.done [#allocation3], 64
        $region76: #{tpu_custom_call.1} parent=71 // pred_fallthru
          _
        // Predicated region
        $region77: #{tpu_custom_call.1} parent=71 // pred_check
          %p418 = pneg %p197
        $region78: #{tpu_custom_call.1} parent=71 // pred_check_branch
          %420 = sbr.rel (%p418) target = $region80
        $region79: #{tpu_custom_call.1} parent=71 // pred_region
          %421 = dma.done [#allocation6], 128
        $region80: #{tpu_custom_call.1} parent=71 // pred_fallthru
          _
        %p422 = scmp.lt.s32.totalorder %s29, 1
        %s423 = scalar_select %p422, %s29, 1
        %s424 = smul.addr %s423, 4
        %s425 = smul.addr %s424, 8
        %s426 = scalar_lea.vmem %s0, %s425
        %p427 = pneg %p50
        %p428 = pneg %p47
        %p429 = pneg %p71
        %p430 = pneg %p68
        %p431 = pneg %p92
        %p432 = pneg %p89
        %p433 = pneg %p113
        %p434 = pneg %p110
        %p435 = pneg %p134
        %p436 = pneg %p131
        %p437 = pneg %p155
        %p438 = pneg %p152
        %p439 = pneg %p176
        %p440 = pneg %p173
        %p441 = pneg %p197
        %p442 = pneg %p194
        %p443 = pneg %p218
        %p444 = pneg %p215
        %p445 = pneg %p239
        %p446 = pneg %p236
        %p447 = pneg %p260
        %p448 = pneg %p257
        %p449 = pneg %p281
        %p450 = pneg %p278
        %p451 = pneg %p302
        %p452 = pneg %p299
        %p453 = pneg %p328
        %p454 = pneg %p325
        %s455 = sand.u32 %s315, 1
        %s456 = scalar_lea.sflag [#allocation4], %s455
        %s457 = sand.u32 %s315, 1
        %s458 = smul.addr %s457, 32
        %s459 = scalar_lea.vmem [#allocation7], %s458
        %p460 = scmp.lt.s32.totalorder %s29, 1
        %s461 = scalar_select %p460, %s29, 1
        %s462 = smul.addr %s461, 4
        %s463 = smul.addr %s462, 8
        %s464 = scalar_lea.vmem %s0, %s463
        %v465 = vld [vmem:[#allocation2] sm:$0xf]
        %v466 = vld [vmem:[%s2] sm:$0xf]
        %v467 = vld [vmem:[%s4] sm:$0xf]
        %v468 = vld [vmem:[%s5] sm:$0xff]
        %v469 = vld [vmem:[%s5 + $0x8] sm:$0xff]
        %v470 = vld [vmem:[%s6] sm:$0xff]
        %v471 = vld [vmem:[%s6 + $0x8] sm:$0xff]
        %v472 = vld [vmem:[#allocation5] sm:$0xff]
        %v473 = vld [vmem:[%s8] sm:$0xff]
        %v474 = vld [vmem:[%s9] sm:$0xff]
        %v475 = vld [vmem:[%s9 + $0x8] sm:$0xff]
        %v476 = vld [vmem:[%s10] sm:$0xff]
        %v477 = vld [vmem:[%s10 + $0x8] sm:$0xff]
        %v478 = vld [vmem:[%s11] sm:$0x1]
        %v479 = vld [vmem:[%s12] sm:$0xff]
        %v480 = vld [vmem:[%s12 + $0x8] sm:$0xff]
        %v481 = vld [vmem:[%s12 + $0x10] sm:$0x1]
        %v482 = vld [vmem:[%s12 + $0x18] sm:$0x1]
        %v483 = vld [vmem:[%s464] sm:$0xff]
        %v484 = vld [vmem:[%s464 + $0x8] sm:$0xff]
        %v485 = vld [vmem:[%s464 + $0x10] sm:$0xff]
        %v486 = vld [vmem:[%s464 + $0x18] sm:$0xff]
        %488 = vset.pattern.permute.xlu0 0
        %489 = vperm.xlu0 %488, %v466
        %v490 = vpop.permute.xlu0 %489
        %vm492 = vcmask 130048
        %v494 = vsel %vm492, %v465, 0
        %496 = vmatprep.subr.mxu0 %v484
        %497 = vmatpush1.msra.mxu0 %v483
        %498 = vmatprep.subr.mxu0 %v486
        %499 = vmatpush1.msra.mxu0 %v485
        %500 = vmatprep.subr.mxu0 0.0
        %501 = vmatpush1.msra.mxu0 0.0
        %502 = vmatprep.subr.mxu0 0.0
        %503 = vmatpush1.msra.mxu0 0.0
        %504 = vmatprep.subr.mxu0 0.0
        %505 = vmatpush1.msra.mxu0 0.0
        %506 = vmatprep.subr.mxu0 0.0
        %507 = vmatpush1.msra.mxu0 0.0
        %508 = vmatprep.subr.mxu0 0.0
        %509 = vmatpush1.msra.mxu0 0.0
        %510 = vmatprep.subr.mxu0 0.0
        %511 = vmatpush1.msra.mxu0 0.0
        %512 = vmatprep.subr.mxu0 0.0
        %513 = vmatpush1.msra.mxu0 0.0
        %514 = vmatprep.subr.mxu0 0.0
        %515 = vmatpush1.msra.mxu0 0.0
        %516 = vmatprep.subr.mxu0 0.0
        %517 = vmatpush1.msra.mxu0 0.0
        %518 = vmatprep.subr.mxu0 0.0
        %519 = vmatpush1.msra.mxu0 0.0
        %520 = vmatprep.subr.mxu0 0.0
        %521 = vmatpush1.msra.mxu0 0.0
        %522 = vmatprep.subr.mxu0 0.0
        %523 = vmatpush1.msra.mxu0 0.0
        %524 = vmatprep.subr.mxu0 0.0
        %525 = vmatpush1.msra.mxu0 0.0
        %526 = vmatprep.subr.mxu0 0.0
        %527 = vmatpush1.msra.mxu0 0.0
        %528 = vmatprep.subr.mxu0 0.0
        %529 = vmatpush1.msra.mxu0 0.0
        %530 = vmatprep.subr.mxu0 0.0
        %531 = vmatpush1.msra.mxu0 0.0
        %532 = vmatprep.subr.mxu0 0.0
        %533 = vmatpush1.msra.mxu0 0.0
        %534 = vmatprep.subr.mxu0 0.0
        %535 = vmatpush1.msra.mxu0 0.0
        %536 = vmatprep.subr.mxu0 0.0
        %537 = vmatpush1.msra.mxu0 0.0
        %538 = vmatprep.subr.mxu0 0.0
        %539 = vmatpush1.msra.mxu0 0.0
        %540 = vmatprep.subr.mxu0 0.0
        %541 = vmatpush1.msra.mxu0 0.0
        %542 = vmatprep.subr.mxu0 0.0
        %543 = vmatpush1.msra.mxu0 0.0
        %544 = vmatprep.subr.mxu0 0.0
        %545 = vmatpush1.msra.mxu0 0.0
        %546 = vmatprep.subr.mxu0 0.0
        %547 = vmatpush1.msra.mxu0 0.0
        %548 = vmatprep.subr.mxu0 0.0
        %549 = vmatpush1.msra.mxu0 0.0
        %550 = vmatprep.subr.mxu0 0.0
        %551 = vmatpush1.msra.mxu0 0.0
        %552 = vmatprep.subr.mxu0 0.0
        %553 = vmatpush1.msra.mxu0 0.0
        %554 = vmatprep.subr.mxu0 0.0
        %555 = vmatpush1.msra.mxu0 0.0
        %556 = vmatprep.subr.mxu0 0.0
        %557 = vmatpush1.msra.mxu0 0.0
        %558 = vmatprep.subr.mxu0 0.0
        %559 = vmatpush1.msra.mxu0 0.0
        %560 = vmatprep.mubr.f32.mxu0 0.0
        %561 = vmatmul.mubr.f32.gmra.mrb[0].mxu0 %v494
        %v562 = vpop.f32.mrb[0].mxu0
        %v563 = vadd.f32 %v490, %v562
        %v564 = vpop.f32.mrb[0].mxu0
        %v565 = vadd.f32 %v490, %v564
        %566 = vdwg.mxu0
        %v567 = vmax.f32 %v563, 0.0
        %v568 = vmax.f32 %v565, 0.0
        %569 = vrot.lane.b32.xlu0 %v567, 17
        %v570 = vpop.permute.xlu0 %569
        %571 = vrot.lane.b32.xlu0 %v568, 17
        %v572 = vpop.permute.xlu0 %571
        %v573 = vlaneseq
        %v574 = vand.u32 %v573, 127
        %vm575 = vcmp.lt.s32.totalorder %v574, 17
        %v576 = vsel %vm575, %v570, %v572
        %v577 = vsel %vm575, %v572, %v570
        %v578 = vlaneseq
        %v579 = vshrl.u32 %v578, 7
        %v580 = vsub.s32 0, %v579
        %v581 = vrot.slane %v479, %v580
        %v582 = vlaneseq
        %v583 = vshrl.u32 %v582, 7
        %v584 = vsub.s32 0, %v583
        %v585 = vrot.slane %v480, %v584
        %v586 = vmul.f32 %v577, %v581
        %v587 = vmul.f32 %v576, %v585
        %v588 = vld [vmem:[%s3] sm:$0xf]
        %589 = vrot.lane.b32.xlu0 %v567, 16
        %v590 = vpop.permute.xlu0 %589
        %591 = vrot.lane.b32.xlu0 %v568, 16
        %v592 = vpop.permute.xlu0 %591
        %vm593 = vcmp.lt.s32.totalorder %v574, 16
        %v594 = vsel %vm593, %v590, %v592
        %v595 = vsel %vm593, %v592, %v590
        %v596 = vlaneseq
        %v597 = vshrl.u32 %v596, 7
        %v598 = vsub.s32 1, %v597
        %v599 = vrot.slane %v479, %v598
        %v600 = vlaneseq
        %v601 = vshrl.u32 %v600, 7
        %v602 = vsub.s32 1, %v601
        %v603 = vrot.slane %v480, %v602
        %v604 = vmul.f32 %v595, %v599
        %v605 = vmul.f32 %v594, %v603
        %s606 = scalar_lea.vmem %s3, 4
        %v607 = vld [vmem:[%s606] sm:$0xf]
        %vm608 = vcmask 31744
        %v610 = vsel %vm608, %v607, 0
        %vm612 = vcmask 1043456
        %v614 = vsel %vm612, %v604, 0
        %v617 = vsel %vm612, %v605, 0
        %619 = vmatprep.subr.mxu0 %v617
        %620 = vmatpush1.msra.mxu0 %v614
        %621 = vmatprep.subr.mxu0 0.0
        %622 = vmatpush1.msra.mxu0 0.0
        %623 = vmatprep.subr.mxu0 0.0
        %624 = vmatpush1.msra.mxu0 0.0
        %625 = vmatprep.subr.mxu0 0.0
        %626 = vmatpush1.msra.mxu0 0.0
        %627 = vmatprep.subr.mxu0 0.0
        %628 = vmatpush1.msra.mxu0 0.0
        %629 = vmatprep.subr.mxu0 0.0
        %630 = vmatpush1.msra.mxu0 0.0
        %631 = vmatprep.subr.mxu0 0.0
        %632 = vmatpush1.msra.mxu0 0.0
        %633 = vmatprep.subr.mxu0 0.0
        %634 = vmatpush1.msra.mxu0 0.0
        %635 = vmatprep.subr.mxu0 0.0
        %636 = vmatpush1.msra.mxu0 0.0
        %637 = vmatprep.subr.mxu0 0.0
        %638 = vmatpush1.msra.mxu0 0.0
        %639 = vmatprep.subr.mxu0 0.0
        %640 = vmatpush1.msra.mxu0 0.0
        %641 = vmatprep.subr.mxu0 0.0
        %642 = vmatpush1.msra.mxu0 0.0
        %643 = vmatprep.subr.mxu0 0.0
        %644 = vmatpush1.msra.mxu0 0.0
        %645 = vmatprep.subr.mxu0 0.0
        %646 = vmatpush1.msra.mxu0 0.0
        %647 = vmatprep.subr.mxu0 0.0
        %648 = vmatpush1.msra.mxu0 0.0
        %649 = vmatprep.subr.mxu0 0.0
        %650 = vmatpush1.msra.mxu0 0.0
        %651 = vmatprep.subr.mxu0 0.0
        %652 = vmatpush1.msra.mxu0 0.0
        %653 = vmatprep.subr.mxu0 0.0
        %654 = vmatpush1.msra.mxu0 0.0
        %655 = vmatprep.subr.mxu0 0.0
        %656 = vmatpush1.msra.mxu0 0.0
        %657 = vmatprep.subr.mxu0 0.0
        %658 = vmatpush1.msra.mxu0 0.0
        %659 = vmatprep.subr.mxu0 0.0
        %660 = vmatpush1.msra.mxu0 0.0
        %661 = vmatprep.subr.mxu0 0.0
        %662 = vmatpush1.msra.mxu0 0.0
        %663 = vmatprep.subr.mxu0 0.0
        %664 = vmatpush1.msra.mxu0 0.0
        %665 = vmatprep.subr.mxu0 0.0
        %666 = vmatpush1.msra.mxu0 0.0
        %667 = vmatprep.subr.mxu0 0.0
        %668 = vmatpush1.msra.mxu0 0.0
        %669 = vmatprep.subr.mxu0 0.0
        %670 = vmatpush1.msra.mxu0 0.0
        %671 = vmatprep.subr.mxu0 0.0
        %672 = vmatpush1.msra.mxu0 0.0
        %673 = vmatprep.subr.mxu0 0.0
        %674 = vmatpush1.msra.mxu0 0.0
        %675 = vmatprep.subr.mxu0 0.0
        %676 = vmatpush1.msra.mxu0 0.0
        %677 = vmatprep.subr.mxu0 0.0
        %678 = vmatpush1.msra.mxu0 0.0
        %679 = vmatprep.subr.mxu0 0.0
        %680 = vmatpush1.msra.mxu0 0.0
        %681 = vmatprep.subr.mxu0 0.0
        %682 = vmatpush1.msra.mxu0 0.0
        %683 = vmatprep.mubr.f32.mxu0 0.0
        %684 = vmatmul.mubr.f32.gmra.mrb[0].mxu0 %v610
        %v685 = vpop.f32.mrb[0].mxu0
        %v686 = vadd.f32 0.0, %v685
        %v687 = vpop.f32.mrb[0].mxu0
        %v688 = vadd.f32 0.0, %v687
        %689 = vdwg.mxu0
        %v691 = vsel %vm608, %v588, 0
        %v694 = vsel %vm612, %v586, 0
        %v697 = vsel %vm612, %v587, 0
        %699 = vmatprep.subr.mxu0 %v697
        %700 = vmatpush1.msra.mxu0 %v694
        %701 = vmatprep.subr.mxu0 0.0
        %702 = vmatpush1.msra.mxu0 0.0
        %703 = vmatprep.subr.mxu0 0.0
        %704 = vmatpush1.msra.mxu0 0.0
        %705 = vmatprep.subr.mxu0 0.0
        %706 = vmatpush1.msra.mxu0 0.0
        %707 = vmatprep.subr.mxu0 0.0
        %708 = vmatpush1.msra.mxu0 0.0
        %709 = vmatprep.subr.mxu0 0.0
        %710 = vmatpush1.msra.mxu0 0.0
        %711 = vmatprep.subr.mxu0 0.0
        %712 = vmatpush1.msra.mxu0 0.0
        %713 = vmatprep.subr.mxu0 0.0
        %714 = vmatpush1.msra.mxu0 0.0
        %715 = vmatprep.subr.mxu0 0.0
        %716 = vmatpush1.msra.mxu0 0.0
        %717 = vmatprep.subr.mxu0 0.0
        %718 = vmatpush1.msra.mxu0 0.0
        %719 = vmatprep.subr.mxu0 0.0
        %720 = vmatpush1.msra.mxu0 0.0
        %721 = vmatprep.subr.mxu0 0.0
        %722 = vmatpush1.msra.mxu0 0.0
        %723 = vmatprep.subr.mxu0 0.0
        %724 = vmatpush1.msra.mxu0 0.0
        %725 = vmatprep.subr.mxu0 0.0
        %726 = vmatpush1.msra.mxu0 0.0
        %727 = vmatprep.subr.mxu0 0.0
        %728 = vmatpush1.msra.mxu0 0.0
        %729 = vmatprep.subr.mxu0 0.0
        %730 = vmatpush1.msra.mxu0 0.0
        %731 = vmatprep.subr.mxu0 0.0
        %732 = vmatpush1.msra.mxu0 0.0
        %733 = vmatprep.subr.mxu0 0.0
        %734 = vmatpush1.msra.mxu0 0.0
        %735 = vmatprep.subr.mxu0 0.0
        %736 = vmatpush1.msra.mxu0 0.0
        %737 = vmatprep.subr.mxu0 0.0
        %738 = vmatpush1.msra.mxu0 0.0
        %739 = vmatprep.subr.mxu0 0.0
        %740 = vmatpush1.msra.mxu0 0.0
        %741 = vmatprep.subr.mxu0 0.0
        %742 = vmatpush1.msra.mxu0 0.0
        %743 = vmatprep.subr.mxu0 0.0
        %744 = vmatpush1.msra.mxu0 0.0
        %745 = vmatprep.subr.mxu0 0.0
        %746 = vmatpush1.msra.mxu0 0.0
        %747 = vmatprep.subr.mxu0 0.0
        %748 = vmatpush1.msra.mxu0 0.0
        %749 = vmatprep.subr.mxu0 0.0
        %750 = vmatpush1.msra.mxu0 0.0
        %751 = vmatprep.subr.mxu0 0.0
        %752 = vmatpush1.msra.mxu0 0.0
        %753 = vmatprep.subr.mxu0 0.0
        %754 = vmatpush1.msra.mxu0 0.0
        %755 = vmatprep.subr.mxu0 0.0
        %756 = vmatpush1.msra.mxu0 0.0
        %757 = vmatprep.subr.mxu0 0.0
        %758 = vmatpush1.msra.mxu0 0.0
        %759 = vmatprep.subr.mxu0 0.0
        %760 = vmatpush1.msra.mxu0 0.0
        %761 = vmatprep.subr.mxu0 0.0
        %762 = vmatpush1.msra.mxu0 0.0
        %763 = vmatprep.mubr.f32.mxu0 0.0
        %764 = vmatmul.mubr.f32.gmra.mrb[0].mxu0 %v691
        %v765 = vpop.f32.mrb[0].mxu0
        %v766 = vadd.f32 %v686, %v765
        %v767 = vpop.f32.mrb[0].mxu0
        %v768 = vadd.f32 %v688, %v767
        %769 = vdwg.mxu0
        %770 = vrot.lane.b32.xlu0 %v567, 15
        %v771 = vpop.permute.xlu0 %770
        %772 = vrot.lane.b32.xlu0 %v568, 15
        %v773 = vpop.permute.xlu0 %772
        %vm774 = vcmp.lt.s32.totalorder %v574, 15
        %v775 = vsel %vm774, %v771, %v773
        %v776 = vsel %vm774, %v773, %v771
        %v777 = vlaneseq
        %v778 = vshrl.u32 %v777, 7
        %v779 = vsub.s32 2, %v778
        %v780 = vrot.slane %v479, %v779
        %v781 = vlaneseq
        %v782 = vshrl.u32 %v781, 7
        %v783 = vsub.s32 2, %v782
        %v784 = vrot.slane %v480, %v783
        %v785 = vmul.f32 %v776, %v780
        %v786 = vmul.f32 %v775, %v784
        %s787 = scalar_lea.vmem %s3, 8
        %v788 = vld [vmem:[%s787] sm:$0xf]
        %v790 = vsel %vm608, %v788, 0
        %v793 = vsel %vm612, %v785, 0
        %v796 = vsel %vm612, %v786, 0
        %798 = vmatprep.subr.mxu0 %v796
        %799 = vmatpush1.msra.mxu0 %v793
        %800 = vmatprep.subr.mxu0 0.0
        %801 = vmatpush1.msra.mxu0 0.0
        %802 = vmatprep.subr.mxu0 0.0
        %803 = vmatpush1.msra.mxu0 0.0
        %804 = vmatprep.subr.mxu0 0.0
        %805 = vmatpush1.msra.mxu0 0.0
        %806 = vmatprep.subr.mxu0 0.0
        %807 = vmatpush1.msra.mxu0 0.0
        %808 = vmatprep.subr.mxu0 0.0
        %809 = vmatpush1.msra.mxu0 0.0
        %810 = vmatprep.subr.mxu0 0.0
        %811 = vmatpush1.msra.mxu0 0.0
        %812 = vmatprep.subr.mxu0 0.0
        %813 = vmatpush1.msra.mxu0 0.0
        %814 = vmatprep.subr.mxu0 0.0
        %815 = vmatpush1.msra.mxu0 0.0
        %816 = vmatprep.subr.mxu0 0.0
        %817 = vmatpush1.msra.mxu0 0.0
        %818 = vmatprep.subr.mxu0 0.0
        %819 = vmatpush1.msra.mxu0 0.0
        %820 = vmatprep.subr.mxu0 0.0
        %821 = vmatpush1.msra.mxu0 0.0
        %822 = vmatprep.subr.mxu0 0.0
        %823 = vmatpush1.msra.mxu0 0.0
        %824 = vmatprep.subr.mxu0 0.0
        %825 = vmatpush1.msra.mxu0 0.0
        %826 = vmatprep.subr.mxu0 0.0
        %827 = vmatpush1.msra.mxu0 0.0
        %828 = vmatprep.subr.mxu0 0.0
        %829 = vmatpush1.msra.mxu0 0.0
        %830 = vmatprep.subr.mxu0 0.0
        %831 = vmatpush1.msra.mxu0 0.0
        %832 = vmatprep.subr.mxu0 0.0
        %833 = vmatpush1.msra.mxu0 0.0
        %834 = vmatprep.subr.mxu0 0.0
        %835 = vmatpush1.msra.mxu0 0.0
        %836 = vmatprep.subr.mxu0 0.0
        %837 = vmatpush1.msra.mxu0 0.0
        %838 = vmatprep.subr.mxu0 0.0
        %839 = vmatpush1.msra.mxu0 0.0
        %840 = vmatprep.subr.mxu0 0.0
        %841 = vmatpush1.msra.mxu0 0.0
        %842 = vmatprep.subr.mxu0 0.0
        %843 = vmatpush1.msra.mxu0 0.0
        %844 = vmatprep.subr.mxu0 0.0
        %845 = vmatpush1.msra.mxu0 0.0
        %846 = vmatprep.subr.mxu0 0.0
        %847 = vmatpush1.msra.mxu0 0.0
        %848 = vmatprep.subr.mxu0 0.0
        %849 = vmatpush1.msra.mxu0 0.0
        %850 = vmatprep.subr.mxu0 0.0
        %851 = vmatpush1.msra.mxu0 0.0
        %852 = vmatprep.subr.mxu0 0.0
        %853 = vmatpush1.msra.mxu0 0.0
        %854 = vmatprep.subr.mxu0 0.0
        %855 = vmatpush1.msra.mxu0 0.0
        %856 = vmatprep.subr.mxu0 0.0
        %857 = vmatpush1.msra.mxu0 0.0
        %858 = vmatprep.subr.mxu0 0.0
        %859 = vmatpush1.msra.mxu0 0.0
        %860 = vmatprep.subr.mxu0 0.0
        %861 = vmatpush1.msra.mxu0 0.0
        %862 = vmatprep.mubr.f32.mxu0 0.0
        %863 = vmatmul.mubr.f32.gmra.mrb[0].mxu0 %v790
        %v864 = vpop.f32.mrb[0].mxu0
        %v865 = vadd.f32 0.0, %v864
        %v866 = vpop.f32.mrb[0].mxu0
        %v867 = vadd.f32 0.0, %v866
        %868 = vdwg.mxu0
        %v869 = vadd.f32 %v766, %v865
        %v870 = vadd.f32 %v768, %v867
        %871 = vrot.lane.b32.xlu0 %v567, 1
        %v872 = vpop.permute.xlu0 %871
        %873 = vrot.lane.b32.xlu0 %v568, 1
        %v874 = vpop.permute.xlu0 %873
        %vm875 = vcmp.lt.s32.totalorder %v574, 1
        %v876 = vsel %vm875, %v872, %v874
        %v877 = vsel %vm875, %v874, %v872
        %v878 = vlaneseq
        %v879 = vshrl.u32 %v878, 7
        %v880 = vsub.s32 3, %v879
        %v881 = vrot.slane %v479, %v880
        %v882 = vlaneseq
        %v883 = vshrl.u32 %v882, 7
        %v884 = vsub.s32 3, %v883
        %v885 = vrot.slane %v480, %v884
        %v886 = vmul.f32 %v877, %v881
        %v887 = vmul.f32 %v876, %v885
        %s888 = scalar_lea.vmem %s3, 12
        %v889 = vld [vmem:[%s888] sm:$0xf]
        %v891 = vsel %vm608, %v889, 0
        %v894 = vsel %vm612, %v886, 0
        %v897 = vsel %vm612, %v887, 0
        %899 = vmatprep.subr.mxu0 %v897
        %900 = vmatpush1.msra.mxu0 %v894
        %901 = vmatprep.subr.mxu0 0.0
        %902 = vmatpush1.msra.mxu0 0.0
        %903 = vmatprep.subr.mxu0 0.0
        %904 = vmatpush1.msra.mxu0 0.0
        %905 = vmatprep.subr.mxu0 0.0
        %906 = vmatpush1.msra.mxu0 0.0
        %907 = vmatprep.subr.mxu0 0.0
        %908 = vmatpush1.msra.mxu0 0.0
        %909 = vmatprep.subr.mxu0 0.0
        %910 = vmatpush1.msra.mxu0 0.0
        %911 = vmatprep.subr.mxu0 0.0
        %912 = vmatpush1.msra.mxu0 0.0
        %913 = vmatprep.subr.mxu0 0.0
        %914 = vmatpush1.msra.mxu0 0.0
        %915 = vmatprep.subr.mxu0 0.0
        %916 = vmatpush1.msra.mxu0 0.0
        %917 = vmatprep.subr.mxu0 0.0
        %918 = vmatpush1.msra.mxu0 0.0
        %919 = vmatprep.subr.mxu0 0.0
        %920 = vmatpush1.msra.mxu0 0.0
        %921 = vmatprep.subr.mxu0 0.0
        %922 = vmatpush1.msra.mxu0 0.0
        %923 = vmatprep.subr.mxu0 0.0
        %924 = vmatpush1.msra.mxu0 0.0
        %925 = vmatprep.subr.mxu0 0.0
        %926 = vmatpush1.msra.mxu0 0.0
        %927 = vmatprep.subr.mxu0 0.0
        %928 = vmatpush1.msra.mxu0 0.0
        %929 = vmatprep.subr.mxu0 0.0
        %930 = vmatpush1.msra.mxu0 0.0
        %931 = vmatprep.subr.mxu0 0.0
        %932 = vmatpush1.msra.mxu0 0.0
        %933 = vmatprep.subr.mxu0 0.0
        %934 = vmatpush1.msra.mxu0 0.0
        %935 = vmatprep.subr.mxu0 0.0
        %936 = vmatpush1.msra.mxu0 0.0
        %937 = vmatprep.subr.mxu0 0.0
        %938 = vmatpush1.msra.mxu0 0.0
        %939 = vmatprep.subr.mxu0 0.0
        %940 = vmatpush1.msra.mxu0 0.0
        %941 = vmatprep.subr.mxu0 0.0
        %942 = vmatpush1.msra.mxu0 0.0
        %943 = vmatprep.subr.mxu0 0.0
        %944 = vmatpush1.msra.mxu0 0.0
        %945 = vmatprep.subr.mxu0 0.0
        %946 = vmatpush1.msra.mxu0 0.0
        %947 = vmatprep.subr.mxu0 0.0
        %948 = vmatpush1.msra.mxu0 0.0
        %949 = vmatprep.subr.mxu0 0.0
        %950 = vmatpush1.msra.mxu0 0.0
        %951 = vmatprep.subr.mxu0 0.0
        %952 = vmatpush1.msra.mxu0 0.0
        %953 = vmatprep.subr.mxu0 0.0
        %954 = vmatpush1.msra.mxu0 0.0
        %955 = vmatprep.subr.mxu0 0.0
        %956 = vmatpush1.msra.mxu0 0.0
        %957 = vmatprep.subr.mxu0 0.0
        %958 = vmatpush1.msra.mxu0 0.0
        %959 = vmatprep.subr.mxu0 0.0
        %960 = vmatpush1.msra.mxu0 0.0
        %961 = vmatprep.subr.mxu0 0.0
        %962 = vmatpush1.msra.mxu0 0.0
        %963 = vmatprep.mubr.f32.mxu0 0.0
        %964 = vmatmul.mubr.f32.gmra.mrb[0].mxu0 %v891
        %v965 = vpop.f32.mrb[0].mxu0
        %v966 = vadd.f32 0.0, %v965
        %v967 = vpop.f32.mrb[0].mxu0
        %v968 = vadd.f32 0.0, %v967
        %969 = vdwg.mxu0
        %v970 = vadd.f32 %v869, %v966
        %v971 = vadd.f32 %v870, %v968
        %s972 = scalar_lea.vmem %s3, 16
        %v973 = vld [vmem:[%s972] sm:$0xf]
        %v975 = vsel %vm608, %v973, 0
        %v978 = vsel %vm612, %v567, 0
        %v981 = vsel %vm612, %v568, 0
        %983 = vmatprep.subr.mxu0 %v981
        %984 = vmatpush1.msra.mxu0 %v978
        %985 = vmatprep.subr.mxu0 0.0
        %986 = vmatpush1.msra.mxu0 0.0
        %987 = vmatprep.subr.mxu0 0.0
        %988 = vmatpush1.msra.mxu0 0.0
        %989 = vmatprep.subr.mxu0 0.0
        %990 = vmatpush1.msra.mxu0 0.0
        %991 = vmatprep.subr.mxu0 0.0
        %992 = vmatpush1.msra.mxu0 0.0
        %993 = vmatprep.subr.mxu0 0.0
        %994 = vmatpush1.msra.mxu0 0.0
        %995 = vmatprep.subr.mxu0 0.0
        %996 = vmatpush1.msra.mxu0 0.0
        %997 = vmatprep.subr.mxu0 0.0
        %998 = vmatpush1.msra.mxu0 0.0
        %999 = vmatprep.subr.mxu0 0.0
        %1000 = vmatpush1.msra.mxu0 0.0
        %1001 = vmatprep.subr.mxu0 0.0
        %1002 = vmatpush1.msra.mxu0 0.0
        %1003 = vmatprep.subr.mxu0 0.0
        %1004 = vmatpush1.msra.mxu0 0.0
        %1005 = vmatprep.subr.mxu0 0.0
        %1006 = vmatpush1.msra.mxu0 0.0
        %1007 = vmatprep.subr.mxu0 0.0
        %1008 = vmatpush1.msra.mxu0 0.0
        %1009 = vmatprep.subr.mxu0 0.0
        %1010 = vmatpush1.msra.mxu0 0.0
        %1011 = vmatprep.subr.mxu0 0.0
        %1012 = vmatpush1.msra.mxu0 0.0
        %1013 = vmatprep.subr.mxu0 0.0
        %1014 = vmatpush1.msra.mxu0 0.0
        %1015 = vmatprep.subr.mxu0 0.0
        %1016 = vmatpush1.msra.mxu0 0.0
        %1017 = vmatprep.subr.mxu0 0.0
        %1018 = vmatpush1.msra.mxu0 0.0
        %1019 = vmatprep.subr.mxu0 0.0
        %1020 = vmatpush1.msra.mxu0 0.0
        %1021 = vmatprep.subr.mxu0 0.0
        %1022 = vmatpush1.msra.mxu0 0.0
        %1023 = vmatprep.subr.mxu0 0.0
        %1024 = vmatpush1.msra.mxu0 0.0
        %1025 = vmatprep.subr.mxu0 0.0
        %1026 = vmatpush1.msra.mxu0 0.0
        %1027 = vmatprep.subr.mxu0 0.0
        %1028 = vmatpush1.msra.mxu0 0.0
        %1029 = vmatprep.subr.mxu0 0.0
        %1030 = vmatpush1.msra.mxu0 0.0
        %1031 = vmatprep.subr.mxu0 0.0
        %1032 = vmatpush1.msra.mxu0 0.0
        %1033 = vmatprep.subr.mxu0 0.0
        %1034 = vmatpush1.msra.mxu0 0.0
        %1035 = vmatprep.subr.mxu0 0.0
        %1036 = vmatpush1.msra.mxu0 0.0
        %1037 = vmatprep.subr.mxu0 0.0
        %1038 = vmatpush1.msra.mxu0 0.0
        %1039 = vmatprep.subr.mxu0 0.0
        %1040 = vmatpush1.msra.mxu0 0.0
        %1041 = vmatprep.subr.mxu0 0.0
        %1042 = vmatpush1.msra.mxu0 0.0
        %1043 = vmatprep.subr.mxu0 0.0
        %1044 = vmatpush1.msra.mxu0 0.0
        %1045 = vmatprep.subr.mxu0 0.0
        %1046 = vmatpush1.msra.mxu0 0.0
        %1047 = vmatprep.mubr.f32.mxu0 0.0
        %1048 = vmatmul.mubr.f32.gmra.mrb[0].mxu0 %v975
        %v1049 = vpop.f32.mrb[0].mxu0
        %v1050 = vadd.f32 0.0, %v1049
        %v1051 = vpop.f32.mrb[0].mxu0
        %v1052 = vadd.f32 0.0, %v1051
        %1053 = vdwg.mxu0
        %v1054 = vadd.f32 %v970, %v1050
        %v1055 = vadd.f32 %v971, %v1052
        %1056 = vrot.lane.b32.xlu0 %v567, 127
        %v1057 = vpop.permute.xlu0 %1056
        %1058 = vrot.lane.b32.xlu0 %v568, 127
        %v1059 = vpop.permute.xlu0 %1058
        %vm1060 = vcmp.lt.s32.totalorder %v574, 127
        %v1061 = vsel %vm1060, %v1057, %v1059
        %v1062 = vsel %vm1060, %v1059, %v1057
        %v1063 = vlaneseq
        %v1064 = vshrl.u32 %v1063, 7
        %v1065 = vsub.s32 5, %v1064
        %v1066 = vrot.slane %v479, %v1065
        %v1067 = vlaneseq
        %v1068 = vshrl.u32 %v1067, 7
        %v1069 = vsub.s32 5, %v1068
        %v1070 = vrot.slane %v480, %v1069
        %v1071 = vmul.f32 %v1061, %v1066
        %v1072 = vmul.f32 %v1062, %v1070
        %s1073 = scalar_lea.vmem %s3, 20
        %v1074 = vld [vmem:[%s1073] sm:$0xf]
        %v1076 = vsel %vm608, %v1074, 0
        %v1079 = vsel %vm612, %v1071, 0
        %v1082 = vsel %vm612, %v1072, 0
        %1084 = vmatprep.subr.mxu0 %v1082
        %1085 = vmatpush1.msra.mxu0 %v1079
        %1086 = vmatprep.subr.mxu0 0.0
        %1087 = vmatpush1.msra.mxu0 0.0
        %1088 = vmatprep.subr.mxu0 0.0
        %1089 = vmatpush1.msra.mxu0 0.0
        %1090 = vmatprep.subr.mxu0 0.0
        %1091 = vmatpush1.msra.mxu0 0.0
        %1092 = vmatprep.subr.mxu0 0.0
        %1093 = vmatpush1.msra.mxu0 0.0
        %1094 = vmatprep.subr.mxu0 0.0
        %1095 = vmatpush1.msra.mxu0 0.0
        %1096 = vmatprep.subr.mxu0 0.0
        %1097 = vmatpush1.msra.mxu0 0.0
        %1098 = vmatprep.subr.mxu0 0.0
        %1099 = vmatpush1.msra.mxu0 0.0
        %1100 = vmatprep.subr.mxu0 0.0
        %1101 = vmatpush1.msra.mxu0 0.0
        %1102 = vmatprep.subr.mxu0 0.0
        %1103 = vmatpush1.msra.mxu0 0.0
        %1104 = vmatprep.subr.mxu0 0.0
        %1105 = vmatpush1.msra.mxu0 0.0
        %1106 = vmatprep.subr.mxu0 0.0
        %1107 = vmatpush1.msra.mxu0 0.0
        %1108 = vmatprep.subr.mxu0 0.0
        %1109 = vmatpush1.msra.mxu0 0.0
        %1110 = vmatprep.subr.mxu0 0.0
        %1111 = vmatpush1.msra.mxu0 0.0
        %1112 = vmatprep.subr.mxu0 0.0
        %1113 = vmatpush1.msra.mxu0 0.0
        %1114 = vmatprep.subr.mxu0 0.0
        %1115 = vmatpush1.msra.mxu0 0.0
        %1116 = vmatprep.subr.mxu0 0.0
        %1117 = vmatpush1.msra.mxu0 0.0
        %1118 = vmatprep.subr.mxu0 0.0
        %1119 = vmatpush1.msra.mxu0 0.0
        %1120 = vmatprep.subr.mxu0 0.0
        %1121 = vmatpush1.msra.mxu0 0.0
        %1122 = vmatprep.subr.mxu0 0.0
        %1123 = vmatpush1.msra.mxu0 0.0
        %1124 = vmatprep.subr.mxu0 0.0
        %1125 = vmatpush1.msra.mxu0 0.0
        %1126 = vmatprep.subr.mxu0 0.0
        %1127 = vmatpush1.msra.mxu0 0.0
        %1128 = vmatprep.subr.mxu0 0.0
        %1129 = vmatpush1.msra.mxu0 0.0
        %1130 = vmatprep.subr.mxu0 0.0
        %1131 = vmatpush1.msra.mxu0 0.0
        %1132 = vmatprep.subr.mxu0 0.0
        %1133 = vmatpush1.msra.mxu0 0.0
        %1134 = vmatprep.subr.mxu0 0.0
        %1135 = vmatpush1.msra.mxu0 0.0
        %1136 = vmatprep.subr.mxu0 0.0
        %1137 = vmatpush1.msra.mxu0 0.0
        %1138 = vmatprep.subr.mxu0 0.0
        %1139 = vmatpush1.msra.mxu0 0.0
        %1140 = vmatprep.subr.mxu0 0.0
        %1141 = vmatpush1.msra.mxu0 0.0
        %1142 = vmatprep.subr.mxu0 0.0
        %1143 = vmatpush1.msra.mxu0 0.0
        %1144 = vmatprep.subr.mxu0 0.0
        %1145 = vmatpush1.msra.mxu0 0.0
        %1146 = vmatprep.subr.mxu0 0.0
        %1147 = vmatpush1.msra.mxu0 0.0
        %1148 = vmatprep.mubr.f32.mxu0 0.0
        %1149 = vmatmul.mubr.f32.gmra.mrb[0].mxu0 %v1076
        %v1150 = vpop.f32.mrb[0].mxu0
        %v1151 = vadd.f32 0.0, %v1150
        %v1152 = vpop.f32.mrb[0].mxu0
        %v1153 = vadd.f32 0.0, %v1152
        %1154 = vdwg.mxu0
        %v1155 = vadd.f32 %v1054, %v1151
        %v1156 = vadd.f32 %v1055, %v1153
        %1157 = vrot.lane.b32.xlu0 %v567, 113
        %v1158 = vpop.permute.xlu0 %1157
        %1159 = vrot.lane.b32.xlu0 %v568, 113
        %v1160 = vpop.permute.xlu0 %1159
        %vm1161 = vcmp.lt.s32.totalorder %v574, 113
        %v1162 = vsel %vm1161, %v1158, %v1160
        %v1163 = vsel %vm1161, %v1160, %v1158
        %v1164 = vlaneseq
        %v1165 = vshrl.u32 %v1164, 7
        %v1166 = vsub.s32 6, %v1165
        %v1167 = vrot.slane %v479, %v1166
        %v1168 = vlaneseq
        %v1169 = vshrl.u32 %v1168, 7
        %v1170 = vsub.s32 6, %v1169
        %v1171 = vrot.slane %v480, %v1170
        %v1172 = vmul.f32 %v1162, %v1167
        %v1173 = vmul.f32 %v1163, %v1171
        %s1174 = scalar_lea.vmem %s3, 24
        %v1175 = vld [vmem:[%s1174] sm:$0xf]
        %v1177 = vsel %vm608, %v1175, 0
        %v1180 = vsel %vm612, %v1172, 0
        %v1183 = vsel %vm612, %v1173, 0
        %1185 = vmatprep.subr.mxu0 %v1183
        %1186 = vmatpush1.msra.mxu0 %v1180
        %1187 = vmatprep.subr.mxu0 0.0
        %1188 = vmatpush1.msra.mxu0 0.0
        %1189 = vmatprep.subr.mxu0 0.0
        %1190 = vmatpush1.msra.mxu0 0.0
        %1191 = vmatprep.subr.mxu0 0.0
        %1192 = vmatpush1.msra.mxu0 0.0
        %1193 = vmatprep.subr.mxu0 0.0
        %1194 = vmatpush1.msra.mxu0 0.0
        %1195 = vmatprep.subr.mxu0 0.0
        %1196 = vmatpush1.msra.mxu0 0.0
        %1197 = vmatprep.subr.mxu0 0.0
        %1198 = vmatpush1.msra.mxu0 0.0
        %1199 = vmatprep.subr.mxu0 0.0
        %1200 = vmatpush1.msra.mxu0 0.0
        %1201 = vmatprep.subr.mxu0 0.0
        %1202 = vmatpush1.msra.mxu0 0.0
        %1203 = vmatprep.subr.mxu0 0.0
        %1204 = vmatpush1.msra.mxu0 0.0
        %1205 = vmatprep.subr.mxu0 0.0
        %1206 = vmatpush1.msra.mxu0 0.0
        %1207 = vmatprep.subr.mxu0 0.0
        %1208 = vmatpush1.msra.mxu0 0.0
        %1209 = vmatprep.subr.mxu0 0.0
        %1210 = vmatpush1.msra.mxu0 0.0
        %1211 = vmatprep.subr.mxu0 0.0
        %1212 = vmatpush1.msra.mxu0 0.0
        %1213 = vmatprep.subr.mxu0 0.0
        %1214 = vmatpush1.msra.mxu0 0.0
        %1215 = vmatprep.subr.mxu0 0.0
        %1216 = vmatpush1.msra.mxu0 0.0
        %1217 = vmatprep.subr.mxu0 0.0
        %1218 = vmatpush1.msra.mxu0 0.0
        %1219 = vmatprep.subr.mxu0 0.0
        %1220 = vmatpush1.msra.mxu0 0.0
        %1221 = vmatprep.subr.mxu0 0.0
        %1222 = vmatpush1.msra.mxu0 0.0
        %1223 = vmatprep.subr.mxu0 0.0
        %1224 = vmatpush1.msra.mxu0 0.0
        %1225 = vmatprep.subr.mxu0 0.0
        %1226 = vmatpush1.msra.mxu0 0.0
        %1227 = vmatprep.subr.mxu0 0.0
        %1228 = vmatpush1.msra.mxu0 0.0
        %1229 = vmatprep.subr.mxu0 0.0
        %1230 = vmatpush1.msra.mxu0 0.0
        %1231 = vmatprep.subr.mxu0 0.0
        %1232 = vmatpush1.msra.mxu0 0.0
        %1233 = vmatprep.subr.mxu0 0.0
        %1234 = vmatpush1.msra.mxu0 0.0
        %1235 = vmatprep.subr.mxu0 0.0
        %1236 = vmatpush1.msra.mxu0 0.0
        %1237 = vmatprep.subr.mxu0 0.0
        %1238 = vmatpush1.msra.mxu0 0.0
        %1239 = vmatprep.subr.mxu0 0.0
        %1240 = vmatpush1.msra.mxu0 0.0
        %1241 = vmatprep.subr.mxu0 0.0
        %1242 = vmatpush1.msra.mxu0 0.0
        %1243 = vmatprep.subr.mxu0 0.0
        %1244 = vmatpush1.msra.mxu0 0.0
        %1245 = vmatprep.subr.mxu0 0.0
        %1246 = vmatpush1.msra.mxu0 0.0
        %1247 = vmatprep.subr.mxu0 0.0
        %1248 = vmatpush1.msra.mxu0 0.0
        %1249 = vmatprep.mubr.f32.mxu0 0.0
        %1250 = vmatmul.mubr.f32.gmra.mrb[0].mxu0 %v1177
        %v1251 = vpop.f32.mrb[0].mxu0
        %v1252 = vadd.f32 0.0, %v1251
        %v1253 = vpop.f32.mrb[0].mxu0
        %v1254 = vadd.f32 0.0, %v1253
        %1255 = vdwg.mxu0
        %v1256 = vadd.f32 %v1155, %v1252
        %v1257 = vadd.f32 %v1156, %v1254
        %1258 = vrot.lane.b32.xlu0 %v567, 112
        %v1259 = vpop.permute.xlu0 %1258
        %1260 = vrot.lane.b32.xlu0 %v568, 112
        %v1261 = vpop.permute.xlu0 %1260
        %vm1262 = vcmp.lt.s32.totalorder %v574, 112
        %v1263 = vsel %vm1262, %v1259, %v1261
        %v1264 = vsel %vm1262, %v1261, %v1259
        %v1265 = vlaneseq
        %v1266 = vshrl.u32 %v1265, 7
        %v1267 = vsub.s32 7, %v1266
        %v1268 = vrot.slane %v479, %v1267
        %v1269 = vlaneseq
        %v1270 = vshrl.u32 %v1269, 7
        %v1271 = vsub.s32 7, %v1270
        %v1272 = vrot.slane %v480, %v1271
        %v1273 = vmul.f32 %v1263, %v1268
        %v1274 = vmul.f32 %v1264, %v1272
        %s1275 = scalar_lea.vmem %s3, 28
        %v1276 = vld [vmem:[%s1275] sm:$0xf]
        %v1278 = vsel %vm608, %v1276, 0
        %v1281 = vsel %vm612, %v1273, 0
        %v1284 = vsel %vm612, %v1274, 0
        %1286 = vmatprep.subr.mxu0 %v1284
        %1287 = vmatpush1.msra.mxu0 %v1281
        %1288 = vmatprep.subr.mxu0 0.0
        %1289 = vmatpush1.msra.mxu0 0.0
        %1290 = vmatprep.subr.mxu0 0.0
        %1291 = vmatpush1.msra.mxu0 0.0
        %1292 = vmatprep.subr.mxu0 0.0
        %1293 = vmatpush1.msra.mxu0 0.0
        %1294 = vmatprep.subr.mxu0 0.0
        %1295 = vmatpush1.msra.mxu0 0.0
        %1296 = vmatprep.subr.mxu0 0.0
        %1297 = vmatpush1.msra.mxu0 0.0
        %1298 = vmatprep.subr.mxu0 0.0
        %1299 = vmatpush1.msra.mxu0 0.0
        %1300 = vmatprep.subr.mxu0 0.0
        %1301 = vmatpush1.msra.mxu0 0.0
        %1302 = vmatprep.subr.mxu0 0.0
        %1303 = vmatpush1.msra.mxu0 0.0
        %1304 = vmatprep.subr.mxu0 0.0
        %1305 = vmatpush1.msra.mxu0 0.0
        %1306 = vmatprep.subr.mxu0 0.0
        %1307 = vmatpush1.msra.mxu0 0.0
        %1308 = vmatprep.subr.mxu0 0.0
        %1309 = vmatpush1.msra.mxu0 0.0
        %1310 = vmatprep.subr.mxu0 0.0
        %1311 = vmatpush1.msra.mxu0 0.0
        %1312 = vmatprep.subr.mxu0 0.0
        %1313 = vmatpush1.msra.mxu0 0.0
        %1314 = vmatprep.subr.mxu0 0.0
        %1315 = vmatpush1.msra.mxu0 0.0
        %1316 = vmatprep.subr.mxu0 0.0
        %1317 = vmatpush1.msra.mxu0 0.0
        %1318 = vmatprep.subr.mxu0 0.0
        %1319 = vmatpush1.msra.mxu0 0.0
        %1320 = vmatprep.subr.mxu0 0.0
        %1321 = vmatpush1.msra.mxu0 0.0
        %1322 = vmatprep.subr.mxu0 0.0
        %1323 = vmatpush1.msra.mxu0 0.0
        %1324 = vmatprep.subr.mxu0 0.0
        %1325 = vmatpush1.msra.mxu0 0.0
        %1326 = vmatprep.subr.mxu0 0.0
        %1327 = vmatpush1.msra.mxu0 0.0
        %1328 = vmatprep.subr.mxu0 0.0
        %1329 = vmatpush1.msra.mxu0 0.0
        %1330 = vmatprep.subr.mxu0 0.0
        %1331 = vmatpush1.msra.mxu0 0.0
        %1332 = vmatprep.subr.mxu0 0.0
        %1333 = vmatpush1.msra.mxu0 0.0
        %1334 = vmatprep.subr.mxu0 0.0
        %1335 = vmatpush1.msra.mxu0 0.0
        %1336 = vmatprep.subr.mxu0 0.0
        %1337 = vmatpush1.msra.mxu0 0.0
        %1338 = vmatprep.subr.mxu0 0.0
        %1339 = vmatpush1.msra.mxu0 0.0
        %1340 = vmatprep.subr.mxu0 0.0
        %1341 = vmatpush1.msra.mxu0 0.0
        %1342 = vmatprep.subr.mxu0 0.0
        %1343 = vmatpush1.msra.mxu0 0.0
        %1344 = vmatprep.subr.mxu0 0.0
        %1345 = vmatpush1.msra.mxu0 0.0
        %1346 = vmatprep.subr.mxu0 0.0
        %1347 = vmatpush1.msra.mxu0 0.0
        %1348 = vmatprep.subr.mxu0 0.0
        %1349 = vmatpush1.msra.mxu0 0.0
        %1350 = vmatprep.mubr.f32.mxu0 0.0
        %1351 = vmatmul.mubr.f32.gmra.mrb[0].mxu0 %v1278
        %v1352 = vpop.f32.mrb[0].mxu0
        %v1353 = vadd.f32 0.0, %v1352
        %v1354 = vpop.f32.mrb[0].mxu0
        %v1355 = vadd.f32 0.0, %v1354
        %1356 = vdwg.mxu0
        %v1357 = vadd.f32 %v1256, %v1353
        %v1358 = vadd.f32 %v1257, %v1355
        %1359 = vrot.lane.b32.xlu0 %v567, 111
        %v1360 = vpop.permute.xlu0 %1359
        %1361 = vrot.lane.b32.xlu0 %v568, 111
        %v1362 = vpop.permute.xlu0 %1361
        %vm1363 = vcmp.lt.s32.totalorder %v574, 111
        %v1364 = vsel %vm1363, %v1360, %v1362
        %v1365 = vsel %vm1363, %v1362, %v1360
        %v1366 = vlaneseq
        %v1367 = vshrl.u32 %v1366, 7
        %v1368 = vsub.s32 0, %v1367
        %v1369 = vrot.slane %v481, %v1368
        %v1370 = vlaneseq
        %v1371 = vshrl.u32 %v1370, 7
        %v1372 = vsub.s32 0, %v1371
        %v1373 = vrot.slane %v482, %v1372
        %v1374 = vmul.f32 %v1364, %v1369
        %v1375 = vmul.f32 %v1365, %v1373
        %s1376 = scalar_lea.vmem %s3, 32
        %v1377 = vld [vmem:[%s1376] sm:$0xf]
        %v1379 = vsel %vm608, %v1377, 0
        %v1382 = vsel %vm612, %v1374, 0
        %v1385 = vsel %vm612, %v1375, 0
        %1387 = vmatprep.subr.mxu0 %v1385
        %1388 = vmatpush1.msra.mxu0 %v1382
        %1389 = vmatprep.subr.mxu0 0.0
        %1390 = vmatpush1.msra.mxu0 0.0
        %1391 = vmatprep.subr.mxu0 0.0
        %1392 = vmatpush1.msra.mxu0 0.0
        %1393 = vmatprep.subr.mxu0 0.0
        %1394 = vmatpush1.msra.mxu0 0.0
        %1395 = vmatprep.subr.mxu0 0.0
        %1396 = vmatpush1.msra.mxu0 0.0
        %1397 = vmatprep.subr.mxu0 0.0
        %1398 = vmatpush1.msra.mxu0 0.0
        %1399 = vmatprep.subr.mxu0 0.0
        %1400 = vmatpush1.msra.mxu0 0.0
        %1401 = vmatprep.subr.mxu0 0.0
        %1402 = vmatpush1.msra.mxu0 0.0
        %1403 = vmatprep.subr.mxu0 0.0
        %1404 = vmatpush1.msra.mxu0 0.0
        %1405 = vmatprep.subr.mxu0 0.0
        %1406 = vmatpush1.msra.mxu0 0.0
        %1407 = vmatprep.subr.mxu0 0.0
        %1408 = vmatpush1.msra.mxu0 0.0
        %1409 = vmatprep.subr.mxu0 0.0
        %1410 = vmatpush1.msra.mxu0 0.0
        %1411 = vmatprep.subr.mxu0 0.0
        %1412 = vmatpush1.msra.mxu0 0.0
        %1413 = vmatprep.subr.mxu0 0.0
        %1414 = vmatpush1.msra.mxu0 0.0
        %1415 = vmatprep.subr.mxu0 0.0
        %1416 = vmatpush1.msra.mxu0 0.0
        %1417 = vmatprep.subr.mxu0 0.0
        %1418 = vmatpush1.msra.mxu0 0.0
        %1419 = vmatprep.subr.mxu0 0.0
        %1420 = vmatpush1.msra.mxu0 0.0
        %1421 = vmatprep.subr.mxu0 0.0
        %1422 = vmatpush1.msra.mxu0 0.0
        %1423 = vmatprep.subr.mxu0 0.0
        %1424 = vmatpush1.msra.mxu0 0.0
        %1425 = vmatprep.subr.mxu0 0.0
        %1426 = vmatpush1.msra.mxu0 0.0
        %1427 = vmatprep.subr.mxu0 0.0
        %1428 = vmatpush1.msra.mxu0 0.0
        %1429 = vmatprep.subr.mxu0 0.0
        %1430 = vmatpush1.msra.mxu0 0.0
        %1431 = vmatprep.subr.mxu0 0.0
        %1432 = vmatpush1.msra.mxu0 0.0
        %1433 = vmatprep.subr.mxu0 0.0
        %1434 = vmatpush1.msra.mxu0 0.0
        %1435 = vmatprep.subr.mxu0 0.0
        %1436 = vmatpush1.msra.mxu0 0.0
        %1437 = vmatprep.subr.mxu0 0.0
        %1438 = vmatpush1.msra.mxu0 0.0
        %1439 = vmatprep.subr.mxu0 0.0
        %1440 = vmatpush1.msra.mxu0 0.0
        %1441 = vmatprep.subr.mxu0 0.0
        %1442 = vmatpush1.msra.mxu0 0.0
        %1443 = vmatprep.subr.mxu0 0.0
        %1444 = vmatpush1.msra.mxu0 0.0
        %1445 = vmatprep.subr.mxu0 0.0
        %1446 = vmatpush1.msra.mxu0 0.0
        %1447 = vmatprep.subr.mxu0 0.0
        %1448 = vmatpush1.msra.mxu0 0.0
        %1449 = vmatprep.subr.mxu0 0.0
        %1450 = vmatpush1.msra.mxu0 0.0
        %1451 = vmatprep.mubr.f32.mxu0 0.0
        %1452 = vmatmul.mubr.f32.gmra.mrb[0].mxu0 %v1379
        %v1453 = vpop.f32.mrb[0].mxu0
        %v1454 = vadd.f32 0.0, %v1453
        %v1455 = vpop.f32.mrb[0].mxu0
        %v1456 = vadd.f32 0.0, %v1455
        %1457 = vdwg.mxu0
        %v1458 = vadd.f32 %v1357, %v1454
        %v1459 = vadd.f32 %v1358, %v1456
        %1461 = vset.pattern.permute.xlu0 0
        %1462 = vperm.xlu0 %1461, %v467
        %v1463 = vpop.permute.xlu0 %1462
        %v1465 = vadd.f32 %v1458, %v1463
        %v1466 = vadd.f32 %v1459, %v1463
        %v1467 = vmax.f32 %v1465, 0.0
        %v1468 = vmax.f32 %v1466, 0.0
        %1470 = vset.pattern.permute.xlu0 0
        %1471 = vperm.xlu0 %1470, %v470
        %v1472 = vpop.permute.xlu0 %1471
        %1475 = vset.pattern.permute.xlu0 0
        %1476 = vperm.xlu0 %1475, %v471
        %v1477 = vpop.permute.xlu0 %1476
        %v1480 = vsel %vm608, %v468, 0
        %v1483 = vsel %vm608, %v469, 0
        %v1486 = vsel %vm612, %v1467, 0
        %v1489 = vsel %vm612, %v1468, 0
        %1491 = vmatprep.subr.mxu0 %v1489
        %1492 = vmatpush1.msra.mxu0 %v1486
        %1493 = vmatprep.subr.mxu0 0.0
        %1494 = vmatpush1.msra.mxu0 0.0
        %1495 = vmatprep.subr.mxu0 0.0
        %1496 = vmatpush1.msra.mxu0 0.0
        %1497 = vmatprep.subr.mxu0 0.0
        %1498 = vmatpush1.msra.mxu0 0.0
        %1499 = vmatprep.subr.mxu0 0.0
        %1500 = vmatpush1.msra.mxu0 0.0
        %1501 = vmatprep.subr.mxu0 0.0
        %1502 = vmatpush1.msra.mxu0 0.0
        %1503 = vmatprep.subr.mxu0 0.0
        %1504 = vmatpush1.msra.mxu0 0.0
        %1505 = vmatprep.subr.mxu0 0.0
        %1506 = vmatpush1.msra.mxu0 0.0
        %1507 = vmatprep.subr.mxu0 0.0
        %1508 = vmatpush1.msra.mxu0 0.0
        %1509 = vmatprep.subr.mxu0 0.0
        %1510 = vmatpush1.msra.mxu0 0.0
        %1511 = vmatprep.subr.mxu0 0.0
        %1512 = vmatpush1.msra.mxu0 0.0
        %1513 = vmatprep.subr.mxu0 0.0
        %1514 = vmatpush1.msra.mxu0 0.0
        %1515 = vmatprep.subr.mxu0 0.0
        %1516 = vmatpush1.msra.mxu0 0.0
        %1517 = vmatprep.subr.mxu0 0.0
        %1518 = vmatpush1.msra.mxu0 0.0
        %1519 = vmatprep.subr.mxu0 0.0
        %1520 = vmatpush1.msra.mxu0 0.0
        %1521 = vmatprep.subr.mxu0 0.0
        %1522 = vmatpush1.msra.mxu0 0.0
        %1523 = vmatprep.subr.mxu0 0.0
        %1524 = vmatpush1.msra.mxu0 0.0
        %1525 = vmatprep.subr.mxu0 0.0
        %1526 = vmatpush1.msra.mxu0 0.0
        %1527 = vmatprep.subr.mxu0 0.0
        %1528 = vmatpush1.msra.mxu0 0.0
        %1529 = vmatprep.subr.mxu0 0.0
        %1530 = vmatpush1.msra.mxu0 0.0
        %1531 = vmatprep.subr.mxu0 0.0
        %1532 = vmatpush1.msra.mxu0 0.0
        %1533 = vmatprep.subr.mxu0 0.0
        %1534 = vmatpush1.msra.mxu0 0.0
        %1535 = vmatprep.subr.mxu0 0.0
        %1536 = vmatpush1.msra.mxu0 0.0
        %1537 = vmatprep.subr.mxu0 0.0
        %1538 = vmatpush1.msra.mxu0 0.0
        %1539 = vmatprep.subr.mxu0 0.0
        %1540 = vmatpush1.msra.mxu0 0.0
        %1541 = vmatprep.subr.mxu0 0.0
        %1542 = vmatpush1.msra.mxu0 0.0
        %1543 = vmatprep.subr.mxu0 0.0
        %1544 = vmatpush1.msra.mxu0 0.0
        %1545 = vmatprep.subr.mxu0 0.0
        %1546 = vmatpush1.msra.mxu0 0.0
        %1547 = vmatprep.subr.mxu0 0.0
        %1548 = vmatpush1.msra.mxu0 0.0
        %1549 = vmatprep.subr.mxu0 0.0
        %1550 = vmatpush1.msra.mxu0 0.0
        %1551 = vmatprep.subr.mxu0 0.0
        %1552 = vmatpush1.msra.mxu0 0.0
        %1553 = vmatprep.subr.mxu0 0.0
        %1554 = vmatpush1.msra.mxu0 0.0
        %1555 = vmatprep.mubr.f32.mxu0 0.0
        %1556 = vmatmul.mubr.f32.gmra.mrb[0].mxu0 %v1480
        %v1557 = vpop.f32.mrb[0].mxu0
        %v1558 = vadd.f32 %v1472, %v1557
        %v1559 = vpop.f32.mrb[0].mxu0
        %v1560 = vadd.f32 %v1472, %v1559
        %1561 = vmatprep.mubr.f32.mxu0 0.0
        %1562 = vmatmul.mubr.f32.gmra.mrb[0].mxu0 %v1483
        %v1563 = vpop.f32.mrb[0].mxu0
        %v1564 = vadd.f32 %v1477, %v1563
        %v1565 = vpop.f32.mrb[0].mxu0
        %v1566 = vadd.f32 %v1477, %v1565
        %1567 = vdwg.mxu0
        %v1568 = vadd.f32 %v1558, %v1560
        %1569 = vadd.xlane.f32.xlu0 %v1568
        %v1570 = vpop.xlane.xlu0 %1569
        %v1571 = vadd.f32 %v1564, %v1566
        %1572 = vadd.xlane.f32.xlu0 %v1571
        %v1573 = vpop.xlane.xlu0 %1572
        %v1574 = vrcp.pop 256.0
        %v1575 = vmul.f32 %v1570, %v1574
        %v1576 = vmul.f32 %v1573, %v1574
        %v1577 = vmax.f32 %v1558, %v1560
        %1578 = vmax.xlane.f32.xlu0 %v1577
        %v1579 = vpop.xlane.xlu0 %1578
        %v1580 = vmax.f32 %v1564, %v1566
        %1581 = vmax.xlane.f32.xlu0 %v1580
        %v1582 = vpop.xlane.xlu0 %1581
        %vm1583 = vcmp.eq.s32.totalorder %v574, 0
        %v1584 = vsel %vm1583, %v1575, %v1579
        %v1585 = vsel %vm1583, %v1576, %v1582
        %1587 = vset.pattern.permute.xlu0 0
        %1588 = vperm.xlu0 %1587, %v473
        %v1589 = vpop.permute.xlu0 %1588
        %v1592 = vsel %vm492, %v472, 0
        %1594 = vmatprep.subr.mxu0 0.0
        %1595 = vmatpush1.msra.mxu0 %v1584
        %1596 = vmatprep.subr.mxu0 0.0
        %1597 = vmatpush1.msra.mxu0 %v1585
        %1598 = vmatprep.subr.mxu0 0.0
        %1599 = vmatpush1.msra.mxu0 0.0
        %1600 = vmatprep.subr.mxu0 0.0
        %1601 = vmatpush1.msra.mxu0 0.0
        %1602 = vmatprep.subr.mxu0 0.0
        %1603 = vmatpush1.msra.mxu0 0.0
        %1604 = vmatprep.subr.mxu0 0.0
        %1605 = vmatpush1.msra.mxu0 0.0
        %1606 = vmatprep.subr.mxu0 0.0
        %1607 = vmatpush1.msra.mxu0 0.0
        %1608 = vmatprep.subr.mxu0 0.0
        %1609 = vmatpush1.msra.mxu0 0.0
        %1610 = vmatprep.subr.mxu0 0.0
        %1611 = vmatpush1.msra.mxu0 0.0
        %1612 = vmatprep.subr.mxu0 0.0
        %1613 = vmatpush1.msra.mxu0 0.0
        %1614 = vmatprep.subr.mxu0 0.0
        %1615 = vmatpush1.msra.mxu0 0.0
        %1616 = vmatprep.subr.mxu0 0.0
        %1617 = vmatpush1.msra.mxu0 0.0
        %1618 = vmatprep.subr.mxu0 0.0
        %1619 = vmatpush1.msra.mxu0 0.0
        %1620 = vmatprep.subr.mxu0 0.0
        %1621 = vmatpush1.msra.mxu0 0.0
        %1622 = vmatprep.subr.mxu0 0.0
        %1623 = vmatpush1.msra.mxu0 0.0
        %1624 = vmatprep.subr.mxu0 0.0
        %1625 = vmatpush1.msra.mxu0 0.0
        %1626 = vmatprep.subr.mxu0 0.0
        %1627 = vmatpush1.msra.mxu0 0.0
        %1628 = vmatprep.subr.mxu0 0.0
        %1629 = vmatpush1.msra.mxu0 0.0
        %1630 = vmatprep.subr.mxu0 0.0
        %1631 = vmatpush1.msra.mxu0 0.0
        %1632 = vmatprep.subr.mxu0 0.0
        %1633 = vmatpush1.msra.mxu0 0.0
        %1634 = vmatprep.subr.mxu0 0.0
        %1635 = vmatpush1.msra.mxu0 0.0
        %1636 = vmatprep.subr.mxu0 0.0
        %1637 = vmatpush1.msra.mxu0 0.0
        %1638 = vmatprep.subr.mxu0 0.0
        %1639 = vmatpush1.msra.mxu0 0.0
        %1640 = vmatprep.subr.mxu0 0.0
        %1641 = vmatpush1.msra.mxu0 0.0
        %1642 = vmatprep.subr.mxu0 0.0
        %1643 = vmatpush1.msra.mxu0 0.0
        %1644 = vmatprep.subr.mxu0 0.0
        %1645 = vmatpush1.msra.mxu0 0.0
        %1646 = vmatprep.subr.mxu0 0.0
        %1647 = vmatpush1.msra.mxu0 0.0
        %1648 = vmatprep.subr.mxu0 0.0
        %1649 = vmatpush1.msra.mxu0 0.0
        %1650 = vmatprep.subr.mxu0 0.0
        %1651 = vmatpush1.msra.mxu0 0.0
        %1652 = vmatprep.subr.mxu0 0.0
        %1653 = vmatpush1.msra.mxu0 0.0
        %1654 = vmatprep.subr.mxu0 0.0
        %1655 = vmatpush1.msra.mxu0 0.0
        %1656 = vmatprep.subr.mxu0 0.0
        %1657 = vmatpush1.msra.mxu0 0.0
        %1658 = vmatprep.mubr.f32.mxu0 0.0
        %1659 = vmatmul.mubr.f32.gmra.mrb[0].mxu0 %v1592
        %v1660 = vpop.f32.mrb[0].mxu0
        %v1661 = vadd.f32 %v1589, %v1660
        %v1662 = vpop.f32.mrb[0].mxu0
        %1663 = vdwg.mxu0
        %v1664 = vmax.f32 %v1661, 0.0
        %1666 = vset.pattern.permute.xlu0 0
        %1667 = vperm.xlu0 %1666, %v476
        %v1668 = vpop.permute.xlu0 %1667
        %1671 = vset.pattern.permute.xlu0 0
        %1672 = vperm.xlu0 %1671, %v477
        %v1673 = vpop.permute.xlu0 %1672
        %vm1675 = vcmask 64512
        %v1677 = vsel %vm1675, %v474, 0
        %v1680 = vsel %vm1675, %v475, 0
        %1682 = vmatprep.subr.mxu0 0.0
        %1683 = vmatpush1.msra.mxu0 %v1664
        %1684 = vmatprep.subr.mxu0 0.0
        %1685 = vmatpush1.msra.mxu0 0.0
        %1686 = vmatprep.subr.mxu0 0.0
        %1687 = vmatpush1.msra.mxu0 0.0
        %1688 = vmatprep.subr.mxu0 0.0
        %1689 = vmatpush1.msra.mxu0 0.0
        %1690 = vmatprep.subr.mxu0 0.0
        %1691 = vmatpush1.msra.mxu0 0.0
        %1692 = vmatprep.subr.mxu0 0.0
        %1693 = vmatpush1.msra.mxu0 0.0
        %1694 = vmatprep.subr.mxu0 0.0
        %1695 = vmatpush1.msra.mxu0 0.0
        %1696 = vmatprep.subr.mxu0 0.0
        %1697 = vmatpush1.msra.mxu0 0.0
        %1698 = vmatprep.subr.mxu0 0.0
        %1699 = vmatpush1.msra.mxu0 0.0
        %1700 = vmatprep.subr.mxu0 0.0
        %1701 = vmatpush1.msra.mxu0 0.0
        %1702 = vmatprep.subr.mxu0 0.0
        %1703 = vmatpush1.msra.mxu0 0.0
        %1704 = vmatprep.subr.mxu0 0.0
        %1705 = vmatpush1.msra.mxu0 0.0
        %1706 = vmatprep.subr.mxu0 0.0
        %1707 = vmatpush1.msra.mxu0 0.0
        %1708 = vmatprep.subr.mxu0 0.0
        %1709 = vmatpush1.msra.mxu0 0.0
        %1710 = vmatprep.subr.mxu0 0.0
        %1711 = vmatpush1.msra.mxu0 0.0
        %1712 = vmatprep.subr.mxu0 0.0
        %1713 = vmatpush1.msra.mxu0 0.0
        %1714 = vmatprep.subr.mxu0 0.0
        %1715 = vmatpush1.msra.mxu0 0.0
        %1716 = vmatprep.subr.mxu0 0.0
        %1717 = vmatpush1.msra.mxu0 0.0
        %1718 = vmatprep.subr.mxu0 0.0
        %1719 = vmatpush1.msra.mxu0 0.0
        %1720 = vmatprep.subr.mxu0 0.0
        %1721 = vmatpush1.msra.mxu0 0.0
        %1722 = vmatprep.subr.mxu0 0.0
        %1723 = vmatpush1.msra.mxu0 0.0
        %1724 = vmatprep.subr.mxu0 0.0
        %1725 = vmatpush1.msra.mxu0 0.0
        %1726 = vmatprep.subr.mxu0 0.0
        %1727 = vmatpush1.msra.mxu0 0.0
        %1728 = vmatprep.subr.mxu0 0.0
        %1729 = vmatpush1.msra.mxu0 0.0
        %1730 = vmatprep.subr.mxu0 0.0
        %1731 = vmatpush1.msra.mxu0 0.0
        %1732 = vmatprep.subr.mxu0 0.0
        %1733 = vmatpush1.msra.mxu0 0.0
        %1734 = vmatprep.subr.mxu0 0.0
        %1735 = vmatpush1.msra.mxu0 0.0
        %1736 = vmatprep.subr.mxu0 0.0
        %1737 = vmatpush1.msra.mxu0 0.0
        %1738 = vmatprep.subr.mxu0 0.0
        %1739 = vmatpush1.msra.mxu0 0.0
        %1740 = vmatprep.subr.mxu0 0.0
        %1741 = vmatpush1.msra.mxu0 0.0
        %1742 = vmatprep.subr.mxu0 0.0
        %1743 = vmatpush1.msra.mxu0 0.0
        %1744 = vmatprep.subr.mxu0 0.0
        %1745 = vmatpush1.msra.mxu0 0.0
        %1746 = vmatprep.mubr.f32.mxu0 0.0
        %1747 = vmatmul.mubr.f32.gmra.mrb[0].mxu0 %v1677
        %v1748 = vpop.f32.mrb[0].mxu0
        %v1749 = vadd.f32 %v1668, %v1748
        %v1750 = vpop.f32.mrb[0].mxu0
        %1751 = vmatprep.mubr.f32.mxu0 0.0
        %1752 = vmatmul.mubr.f32.gmra.mrb[0].mxu0 %v1680
        %v1753 = vpop.f32.mrb[0].mxu0
        %v1754 = vadd.f32 %v1673, %v1753
        %v1755 = vpop.f32.mrb[0].mxu0
        %1756 = vdwg.mxu0
        %vm1757 = vcmask 15360
        %v1758 = vsel %vm1757, %v1749, 0.0
        %1759 = vadd.xlane.f32.xlu0 %v1758
        %v1760 = vpop.xlane.xlu0 %1759
        %v1761 = vsel %vm1757, %v1754, 0.0
        %1762 = vadd.xlane.f32.xlu0 %v1761
        %v1763 = vpop.xlane.xlu0 %1762
        %v1764 = vxor.u32 %v1760, 2147483648
        %v1765 = vxor.u32 %v1763, 2147483648
        %v1766 = vmul.f32 %v1764, 1.442695
        %v1767 = vpow.pop %v1766
        %v1768 = vmul.f32 %v1765, 1.442695
        %v1769 = vpow.pop %v1768
        %v1770 = vadd.f32 %v1767, 1.0
        %v1771 = vadd.f32 %v1769, 1.0
        %v1772 = vrcp.pop %v1770
        %v1773 = vmul.f32 1.0, %v1772
        %v1774 = vrcp.pop %v1771
        %v1775 = vmul.f32 1.0, %v1774
        %v1776 = vmul.f32 %v1558, %v1773
        %v1777 = vmul.f32 %v1560, %v1773
        %v1778 = vmul.f32 %v1564, %v1775
        %v1779 = vmul.f32 %v1566, %v1775
        %v1780 = vmax.f32 %v1776, %v1778
        %v1781 = vrot.slane %v1780, 4
        %v1782 = vmax.f32 %v1780, %v1781
        %v1783 = vrot.slane %v1782, 2
        %v1784 = vmax.f32 %v1782, %v1783
        %v1785 = vrot.slane %v1784, 1
        %v1786 = vmax.f32 %v1784, %v1785
        %v1787 = vmax.f32 %v1777, %v1779
        %v1788 = vrot.slane %v1787, 4
        %v1789 = vmax.f32 %v1787, %v1788
        %v1790 = vrot.slane %v1789, 2
        %v1791 = vmax.f32 %v1789, %v1790
        %v1792 = vrot.slane %v1791, 1
        %v1793 = vmax.f32 %v1791, %v1792
        %v1794 = vadd.f32 %v1776, %v1778
        %v1795 = vrot.slane %v1794, 4
        %v1796 = vadd.f32 %v1794, %v1795
        %v1797 = vrot.slane %v1796, 2
        %v1798 = vadd.f32 %v1796, %v1797
        %v1799 = vrot.slane %v1798, 1
        %v1800 = vadd.f32 %v1798, %v1799
        %v1801 = vadd.f32 %v1777, %v1779
        %v1802 = vrot.slane %v1801, 4
        %v1803 = vadd.f32 %v1801, %v1802
        %v1804 = vrot.slane %v1803, 2
        %v1805 = vadd.f32 %v1803, %v1804
        %v1806 = vrot.slane %v1805, 1
        %v1807 = vadd.f32 %v1805, %v1806
        %v1808 = vrcp.pop 16.0
        %v1809 = vmul.f32 %v1800, %v1808
        %v1810 = vmul.f32 %v1807, %v1808
        %1812 = vset.pattern.permute.xlu0 0
        %1813 = vperm.xlu0 %1812, %v478
        %v1814 = vpop.permute.xlu0 %1813
        %v1816 = vlaneseq
        %v1817 = vshrl.u32 %v1816, 7
        %v1818 = vsub.s32 0, %v1817
        %v1819 = vrot.slane %v1814, %v1818
        %v1820 = vmul.f32 %v1786, %v1819
        %v1821 = vmul.f32 %v1793, %v1819
        %1822 = vset.pattern.permute.xlu0 1
        %1823 = vperm.xlu0 %1822, %v478
        %v1824 = vpop.permute.xlu0 %1823
        %v1826 = vlaneseq
        %v1827 = vshrl.u32 %v1826, 7
        %v1828 = vsub.s32 0, %v1827
        %v1829 = vrot.slane %v1824, %v1828
        %v1830 = vmul.f32 %v1809, %v1829
        %v1831 = vmul.f32 %v1810, %v1829
        %v1832 = vadd.f32 %v1820, %v1830
        %v1833 = vadd.f32 %v1821, %v1831
        %v1834 = vxor.u32 %v1832, 2147483648
        %v1835 = vxor.u32 %v1833, 2147483648
        %v1836 = vmul.f32 %v1834, 1.442695
        %v1837 = vpow.pop %v1836
        %v1838 = vmul.f32 %v1835, 1.442695
        %v1839 = vpow.pop %v1838
        %v1840 = vadd.f32 %v1837, 1.0
        %v1841 = vadd.f32 %v1839, 1.0
        %v1842 = vrcp.pop %v1840
        %v1843 = vmul.f32 1.0, %v1842
        %v1844 = vrcp.pop %v1841
        %v1845 = vmul.f32 1.0, %v1844
        %v1846 = vmul.f32 %v1776, %v1843
        %v1847 = vmul.f32 %v1777, %v1845
        %v1848 = vmul.f32 %v1778, %v1843
        %v1849 = vmul.f32 %v1779, %v1845
        %v1850 = vadd.f32 %v1846, %v483
        %v1851 = vadd.f32 %v1847, %v484
        %v1852 = vadd.f32 %v1848, %v485
        %v1853 = vadd.f32 %v1849, %v486
        %v1854 = vmax.f32 %v1850, 0.0
        %v1855 = vmax.f32 %v1851, 0.0
        %v1856 = vmax.f32 %v1852, 0.0
        %v1857 = vmax.f32 %v1853, 0.0
        %1858 = vst [vmem:[%s459] sm:$0xff] %v1854
        %1859 = vst [vmem:[%s459 + $0x8] sm:$0xff] %v1855
        %1860 = vst [vmem:[%s459 + $0x10] sm:$0xff] %v1856
        %1861 = vst [vmem:[%s459 + $0x18] sm:$0xff] %v1857
        %s1862 = sand.u32 %s315, 1
        %s1863 = scalar_lea.sflag [#allocation4], %s1862
        %s1864 = sand.u32 %s315, 1
        %s1865 = smul.addr %s1864, 32
        %s1866 = scalar_lea.vmem [#allocation7], %s1865
        // Predicated region
        $region81: #{tpu_custom_call.1} parent=71 // pred_check
          %p1867 = pneg %p325
        $region82: #{tpu_custom_call.1} parent=71 // pred_check_branch
          %1869 = sbr.rel (%p1867) target = $region84
        $region83: #{tpu_custom_call.1} parent=71 // pred_region
          %s1871 = ssub.s32 512, 512
          %1872 = vsyncadd %s1863, %s1871
          %s1873 = smul.addr %s29, 4
          %s1874 = smul.addr %s1873, 128
          %s1875 = scalar_lea.hbm %s13, %s1874
          %s1876 = sshll.u32 %s1866, 4
          %s1877 = int_to_ptr.vmem [resolvable:$true] %s1876
          %1882 = dma.vmem_to_hbm [thread:$0]  %s1877, 512, %s1875, %s1863, 256, 256, 16
        $region84: #{tpu_custom_call.1} parent=71 // pred_fallthru
          _
      $region72: #{tpu_custom_call.1} parent=5 // pred_fallthru
        _
      %p1883 = scmp.le.s32.totalorder 2, %s24
      // Predicated region
      $region85: #{tpu_custom_call.1} parent=5 // pred_check
        %p1884 = pneg %p1883
      $region86: #{tpu_custom_call.1} parent=5 // pred_check_branch
        %1886 = sbr.rel (%p1884) target = $region88
      $region87: #{tpu_custom_call.1} parent=5 // pred_region
        %s1887 = ssub.s32 %s24, 2
        // Predicated region
        $region89: #{tpu_custom_call.1} parent=87 // pred_check
          %p1888 = pneg %p331
        $region90: #{tpu_custom_call.1} parent=87 // pred_check_branch
          %1890 = sbr.rel (%p1888) target = $region92
        $region91: #{tpu_custom_call.1} parent=87 // pred_region
          %s1891 = sand.u32 %s316, 1
          %s1892 = scalar_lea.sflag [#allocation4], %s1891
          %s1893 = sand.u32 %s316, 1
          %s1894 = smul.addr %s1893, 32
          %s1895 = scalar_lea.vmem [#allocation7], %s1894
          %1896 = dma.done %s1892, 512
        $region92: #{tpu_custom_call.1} parent=87 // pred_fallthru
          _
      $region88: #{tpu_custom_call.1} parent=5 // pred_fallthru
        _
    $region6: #{tpu_custom_call.1} parent=1 // loop_footer
      %s28 = sadd.s32 1, %s24
    $region7: #{tpu_custom_call.1} parent=1 // loop_footer_branch
      %23 = sbr.rel target = $region3
    $region8: #{tpu_custom_call.1} parent=1 // loop_exit
      _
    %1897 = vsyncpa [#allocation3], 1
    %s1898 = scalar_lea.sflag [#allocation3], 1
    %1899 = vsyncpa %s1898, 1
    %1900 = vsyncpa [#allocation6], 1
    %1901 = vsyncpa [#allocation4], 1
    %s1902 = scalar_lea.sflag [#allocation4], 1
    %1903 = vsyncpa %s1902, 1

</llo_original>
